<compile_context>
chip_gen: v5e
topology: v5e:2x2
jax: 0.10.0
libtpu: 0.0.40
codegen_flags: <defaults>
</compile_context>

<pallas_src>
import jax
import jax.numpy as jnp
from jax.experimental import pallas as pl
from jax.experimental.pallas import tpu as pltpu

BN_EPS = 1e-5
LANE = 128
VMEM_LIMIT_BYTES = 32 * 1024 * 1024   # plenty for whole-image blocks; safe on v5e/v6e/v7x


def _round_up(v, m):
    return ((v + m - 1) // m) * m


def _mosaic_params():
    return pltpu.CompilerParams(
        dimension_semantics=("parallel",),          # one image per grid step, independent
        vmem_limit_bytes=VMEM_LIMIT_BYTES,
    )


# ----------------------------- Pallas kernels --------------------------------
def _make_conv_stats_kernel(s, ho, wo, cin, cp):
    """3x3 conv (stride s, pad 1) of one image as 9 shifted MXU dots + BN partial sums.

    xph_ref:   (1, s*s, Hpc, Wpc, cin) bf16 phase-split, spatially zero-padded input image
    w_ref:     (9, cin, cp) bf16 per-tap weights (resident across the grid)
    y_ref:     (1, ho, wo, cp) bf16 raw conv output
    stats_ref: (8, cp) f32; row 0 = sum, row 1 = sum of squares, rows 2..7 = 0
    """
    def kernel(xph_ref, w_ref, y_ref, stats_ref):
        acc = jnp.zeros((ho * wo, cp), jnp.float32)
        for di in range(3):
            for dj in range(3):
                ph = (di % s) * s + (dj % s)        # phase of the padded coordinate
                qi, qj = di // s, dj // s           # offset inside that phase (contiguous)
                patch = xph_ref[0, ph, qi:qi + ho, qj:qj + wo, :]
                patch = patch.reshape(ho * wo, cin)
                acc = acc + jnp.dot(patch, w_ref[3 * di + dj],
                                    preferred_element_type=jnp.float32)
        y_ref[...] = acc.reshape(1, ho, wo, cp).astype(y_ref.dtype)
        ssum = jnp.sum(acc, axis=0, keepdims=True)
        ssq = jnp.sum(acc * acc, axis=0, keepdims=True)
        stats_ref[...] = jnp.concatenate(
            [ssum, ssq, jnp.zeros((6, cp), jnp.float32)], axis=0)

    return kernel


def _make_conv2_fused_kernel(ho, wo, cp):
    """Fused relu(bn1(y1)) -> zero-padded VMEM image -> 3x3 stride-1 conv + BN partial sums."""
    hp, wp = ho + 2, wo + 2

    def kernel(y1_ref, scale_ref, shift_ref, w_ref, y2_ref, stats_ref, xpad_ref):
        scale = scale_ref[...].reshape(1, 1, cp)
        shift = shift_ref[...].reshape(1, 1, cp)
        a = jnp.maximum(y1_ref[0].astype(jnp.float32) * scale + shift, 0.0)
        # zero border + interior write == exact zero padding AFTER the fused affine+ReLU
        xpad_ref[...] = jnp.zeros((hp, wp, cp), jnp.bfloat16)
        xpad_ref[1:ho + 1, 1:wo + 1, :] = a.astype(jnp.bfloat16)
        acc = jnp.zeros((ho * wo, cp), jnp.float32)
        for di in range(3):
            for dj in range(3):
                patch = xpad_ref[di:di + ho, dj:dj + wo, :].reshape(ho * wo, cp)
                acc = acc + jnp.dot(patch, w_ref[3 * di + dj],
                                    preferred_element_type=jnp.float32)
        y2_ref[...] = acc.reshape(1, ho, wo, cp).astype(y2_ref.dtype)
        ssum = jnp.sum(acc, axis=0, keepdims=True)
        ssq = jnp.sum(acc * acc, axis=0, keepdims=True)
        stats_ref[...] = jnp.concatenate(
            [ssum, ssq, jnp.zeros((6, cp), jnp.float32)], axis=0)

    return kernel


def _make_epilogue_kernel(ho, wo, cp, c_sc):
    """out = relu(y2*scale2 + shift2 + zero_extend(shortcut)); shortcut kept at natural width."""
    def kernel(y2_ref, scale_ref, shift_ref, sc_ref, out_ref):
        scale = scale_ref[...].reshape(1, 1, cp)
        shift = shift_ref[...].reshape(1, 1, cp)
        t = y2_ref[0].astype(jnp.float32) * scale + shift
        sc = sc_ref[0].astype(jnp.float32)
        if c_sc == cp:
            out_ref[...] = jnp.maximum(t + sc, 0.0).reshape(1, ho, wo, cp).astype(out_ref.dtype)
        else:
            # lanes >= c_sc receive +0 from the (conceptually zero-padded) shortcut
            out_ref[...] = jnp.maximum(t, 0.0).reshape(1, ho, wo, cp).astype(out_ref.dtype)
            low = jnp.maximum(t[..., :c_sc] + sc, 0.0)
            out_ref[0, :, :, 0:c_sc] = low.astype(out_ref.dtype)

    return kernel


# ----------------------------- pallas_call wrappers ---------------------------
def conv_stats(x_ph, w_taps, *, stride, ho, wo):
    n, ss, hpc, wpc, cin = x_ph.shape
    cp = w_taps.shape[-1]
    kernel = _make_conv_stats_kernel(stride, ho, wo, cin, cp)
    return pl.pallas_call(
        kernel,
        out_shape=(
            jax.ShapeDtypeStruct((n, ho, wo, cp), jnp.bfloat16),
            jax.ShapeDtypeStruct((n * 8, cp), jnp.float32),
        ),
        grid=(n,),
        in_specs=[
            pl.BlockSpec((1, ss, hpc, wpc, cin), lambda i: (i, 0, 0, 0, 0)),
            pl.BlockSpec((9, cin, cp), lambda i: (0, 0, 0)),     # weights resident
        ],
        out_specs=(
            pl.BlockSpec((1, ho, wo, cp), lambda i: (i, 0, 0, 0)),
            pl.BlockSpec((8, cp), lambda i: (i, 0)),
        ),
        compiler_params=_mosaic_params(),
    )(x_ph, w_taps)


def conv2_fused(y1, scale, shift, w_taps):
    n, ho, wo, cp = y1.shape
    kernel = _make_conv2_fused_kernel(ho, wo, cp)
    return pl.pallas_call(
        kernel,
        out_shape=(
            jax.ShapeDtypeStruct((n, ho, wo, cp), jnp.bfloat16),
            jax.ShapeDtypeStruct((n * 8, cp), jnp.float32),
        ),
        grid=(n,),
        in_specs=[
            pl.BlockSpec((1, ho, wo, cp), lambda i: (i, 0, 0, 0)),
            pl.BlockSpec((1, cp), lambda i: (0, 0)),
            pl.BlockSpec((1, cp), lambda i: (0, 0)),
            pl.BlockSpec((9, cp, cp), lambda i: (0, 0, 0)),      # weights resident
        ],
        out_specs=(
            pl.BlockSpec((1, ho, wo, cp), lambda i: (i, 0, 0, 0)),
            pl.BlockSpec((8, cp), lambda i: (i, 0)),
        ),
        scratch_shapes=[pltpu.VMEM((ho + 2, wo + 2, cp), jnp.bfloat16)],
        compiler_params=_mosaic_params(),
    )(y1, scale, shift, w_taps)


def bn_add_relu_epilogue(y2, scale, shift, shortcut, out_dtype=jnp.float32):
    n, ho, wo, cp = y2.shape
    c_sc = shortcut.shape[-1]
    kernel = _make_epilogue_kernel(ho, wo, cp, c_sc)
    return pl.pallas_call(
        kernel,
        out_shape=jax.ShapeDtypeStruct((n, ho, wo, cp), out_dtype),
        grid=(n,),
        in_specs=[
            pl.BlockSpec((1, ho, wo, cp), lambda i: (i, 0, 0, 0)),
            pl.BlockSpec((1, cp), lambda i: (0, 0)),
            pl.BlockSpec((1, cp), lambda i: (0, 0)),
            pl.BlockSpec((1, ho, wo, c_sc), lambda i: (i, 0, 0, 0)),
        ],
        out_specs=pl.BlockSpec((1, ho, wo, cp), lambda i: (i, 0, 0, 0)),
        compiler_params=_mosaic_params(),
    )(y2, scale, shift, shortcut)


# ------------------------------ JAX glue --------------------------------------
def _phase_decompose(xp, s):
    """(N, Hp, Wp, C) spatially padded -> (N, s*s, Hp//s, Wp//s, C) phase split.

    Phase index p = (row % s) * s + (col % s) of the PADDED coordinate, so the conv kernel
    only ever takes contiguous slices (no strided in-kernel access for stride 2)."""
    n, hp, wp, c = xp.shape
    if s == 1:
        return xp.reshape(n, 1, hp, wp, c)
    xr = xp.reshape(n, hp // s, s, wp // s, s, c)
    xr = jnp.transpose(xr, (0, 2, 4, 1, 3, 5))
    return xr.reshape(n, s * s, hp // s, wp // s, c)


def conv_weight_to_taps(w_oihw, cin_p, cout_p):
    """torch [Cout, Cin, 3, 3] -> bf16 [9, cin_p, cout_p] per-tap matmul weights (zero padded)."""
    cout, cin = w_oihw.shape[0], w_oihw.shape[1]
    w = jnp.transpose(w_oihw, (2, 3, 1, 0)).reshape(9, cin, cout)
    w = jnp.pad(w, ((0, 0), (0, cin_p - cin), (0, cout_p - cout)))
    return w.astype(jnp.bfloat16)


def _finalize_bn(stats, m_true, gamma_p, beta_p):
    """Reduce per-image partial sums -> folded training-mode BN scale/shift, shape (1, Cp)."""
    cp = stats.shape[-1]
    st = stats.reshape(-1, 8, cp)
    total = jnp.sum(st[:, 0, :], axis=0)
    total_sq = jnp.sum(st[:, 1, :], axis=0)
    mean = total / m_true
    # biased variance (training-mode BN); clamp tiny negatives from E[y^2]-mean^2 cancellation
    var = jnp.maximum(total_sq / m_true - mean * mean, 0.0)
    scale = gamma_p * jax.lax.rsqrt(var + BN_EPS)
    shift = beta_p - mean * scale
    return scale.reshape(1, cp).astype(jnp.float32), shift.reshape(1, cp).astype(jnp.float32)


class MetaBasicBlockPallas:
    expansion = 1

    def __init__(self, in_planes, out_planes, stride, key):
        self.in_planes = in_planes
        self.out_planes = out_planes
        self.stride = stride
        self.cp = _round_up(out_planes, LANE)              # lane-dense channel padding
        k1, k2 = jax.random.split(key)
        w1 = jax.random.normal(k1, (out_planes, in_planes, 3, 3), jnp.float32) * 0.1
        w2 = jax.random.normal(k2, (out_planes, out_planes, 3, 3), jnp.float32) * 0.1
        self.w1_f32 = w1                                   # kept for the pure-JAX reference
        self.w2_f32 = w2
        self.w1_taps = conv_weight_to_taps(w1, in_planes, self.cp)   # (9, Cin, Cp)
        self.w2_taps = conv_weight_to_taps(w2, self.cp, self.cp)     # (9, Cp, Cp), pad rows = 0
        # BN affine params (torch default gamma=1, beta=0); zero beyond the real channels so
        # padded output lanes stay exactly zero through the fused BN.
        pad = self.cp - out_planes
        self.g1 = jnp.pad(jnp.ones((out_planes,), jnp.float32), (0, pad))
        self.b1 = jnp.zeros((self.cp,), jnp.float32)
        self.g2 = jnp.pad(jnp.ones((out_planes,), jnp.float32), (0, pad))
        self.b2 = jnp.zeros((self.cp,), jnp.float32)
        self.needs_pool = (stride != 1) or (in_planes != self.expansion * out_planes)
        self.is_padding = 1 if in_planes != self.expansion * out_planes else 0

    def forward_nhwc(self, x_nhwc):
        x = x_nhwc.astype(jnp.float32)
        n, h, w, cin = x.shape
        s = self.stride
        if s != 1:
            assert h % s == 0 and w % s == 0, "stride-s conv1 expects spatial dims divisible by s"
        ho = (h - 1) // s + 1
        wo = (w - 1) // s + 1

        # ---- stage 1: conv1 + batch stats (in-kernel 3x3 conv, no host im2col) ----
        xp = jnp.pad(x.astype(jnp.bfloat16), ((0, 0), (1, 1), (1, 1), (0, 0)))
        x_ph = _phase_decompose(xp, s)
        y1, st1 = conv_stats(x_ph, self.w1_taps, stride=s, ho=ho, wo=wo)
        s1, sh1 = _finalize_bn(st1, n * ho * wo, self.g1, self.b1)

        # ---- stage 2: bn1 + relu fused into conv2 (+ batch stats) ----
        y2, st2 = conv2_fused(y1, s1, sh1, self.w2_taps)
        s2, sh2 = _finalize_bn(st2, n * ho * wo, self.g2, self.b2)

        # ---- shortcut: identity, or AvgPool2d(2); channel zero-extension happens in-kernel ----
        if self.needs_pool:
            sc = x.reshape(n, h // 2, 2, w // 2, 2, cin).mean(axis=(2, 4))
            # TODO(synk): fold the 2x2 avg-pool into the epilogue kernel read.
        else:
            sc = x
        # Guard: stride==1 with differing planes is inconsistent in the reference module too.
        assert sc.shape[1] == ho and sc.shape[2] == wo, "shortcut/main-path spatial mismatch"

        # ---- epilogue: relu(bn2(conv2(out1)) + shortcut) ----
        out = bn_add_relu_epilogue(y2, s2, sh2, sc.astype(jnp.bfloat16))
        return out[..., :self.out_planes]

    def __call__(self, x_nchw):
        x = jnp.transpose(x_nchw, (0, 2, 3, 1))            # NCHW -> NHWC
        out = self.forward_nhwc(x)
        return jnp.transpose(out, (0, 3, 1, 2))            # back to NCHW


# ------------------------- pure-JAX f32 reference (sanity) --------------------
def reference_forward(block, x_nchw):
    x = jnp.transpose(x_nchw, (0, 2, 3, 1)).astype(jnp.float32)

    def conv3x3(h, w_oihw, stride):
        w = jnp.transpose(w_oihw, (2, 3, 1, 0))            # OIHW -> HWIO
        return jax.lax.conv_general_dilated(
            h, w, (stride, stride), [(1, 1), (1, 1)],
            dimension_numbers=("NHWC", "HWIO", "NHWC"))

    def bn(h, gamma, beta):
        mean = jnp.mean(h, axis=(0, 1, 2))
        var = jnp.mean((h - mean) ** 2, axis=(0, 1, 2))
        return (h - mean) * jax.lax.rsqrt(var + BN_EPS) * gamma + beta

    c = block.out_planes
    h1 = jax.nn.relu(bn(conv3x3(x, block.w1_f32, block.stride), block.g1[:c], block.b1[:c]))
    h2 = bn(conv3x3(h1, block.w2_f32, 1), block.g2[:c], block.b2[:c])
    if block.needs_pool:
        n, hh, ww, cin = x.shape
        sc = x.reshape(n, hh // 2, 2, ww // 2, 2, cin).mean(axis=(2, 4))
        if block.is_padding:
            sc = jnp.concatenate([sc, jnp.zeros_like(sc)], axis=-1)
    else:
        sc = x
    out = jax.nn.relu(h2 + sc)
    return jnp.transpose(out, (0, 3, 1, 2))


if __name__ == "__main__":
    key = jax.random.PRNGKey(0)
    kx1, kp1, kx2, kp2 = jax.random.split(key, 4)

    # Downsampling block: in_planes=4, out_planes=8, stride=2
    # (exercises the phase-split stride-2 conv, AvgPool2d(2) + channel-padded shortcut).
    x1 = jax.random.normal(kx1, (2, 4, 16, 16), jnp.float32)
    blk1 = MetaBasicBlockPallas(in_planes=4, out_planes=8, stride=2, key=kp1)
    out1 = jax.block_until_ready(blk1(x1))
    assert out1.shape == (2, 8, 8, 8)
    assert bool(jnp.all(out1 >= 0.0))                      # final ReLU
    ref1 = jax.block_until_ready(reference_forward(blk1, x1))
    err1 = float(jnp.max(jnp.abs(out1 - ref1)))
    assert err1 < 0.25, f"stride-2 block: max abs error vs reference too large: {err1}"

    # Identity-shortcut block: in_planes = out_planes = 8, stride=1.
    x2 = jax.random.normal(kx2, (2, 8, 8, 8), jnp.float32)
    blk2 = MetaBasicBlockPallas(in_planes=8, out_planes=8, stride=1, key=kp2)
    out2 = jax.block_until_ready(blk2(x2))
    assert out2.shape == (2, 8, 8, 8)
    assert bool(jnp.all(out2 >= 0.0))
    ref2 = jax.block_until_ready(reference_forward(blk2, x2))
    err2 = float(jnp.max(jnp.abs(out2 - ref2)))
    assert err2 < 0.25, f"stride-1 block: max abs error vs reference too large: {err2}"

    print("KERNEL_OK")
</pallas_src>

<mosaic_0001>
module attributes {stable_mosaic.version = 11 : i64} {
  func.func @kernel(%arg0: i32, %arg1: memref<1x4x9x9x4xbf16, #tpu.memory_space<vmem>>, %arg2: memref<9x4x128xbf16, #tpu.memory_space<vmem>>, %arg3: memref<1x8x8x128xbf16, #tpu.memory_space<vmem>>, %arg4: memref<8x128xf32, #tpu.memory_space<vmem>>) attributes {dimension_semantics = [#tpu.dimension_semantics<parallel>], iteration_bounds = array<i64: 2>, scalar_prefetch = 0 : i64, scratch_operands = 0 : i64, tpu.core_type = #tpu.core_type<tc>, window_params = [{transform_indices = @transform_0, window_bounds = array<i64: 1, 4, 9, 9, 4>}, {pipeline_mode = #tpu.pipeline_mode<synchronous>, transform_indices = @transform_1, window_bounds = array<i64: 9, 4, 128>}, {transform_indices = @transform_2, window_bounds = array<i64: 1, 8, 8, 128>}, {transform_indices = @transform_3, window_bounds = array<i64: 8, 128>}]} {
    %cst = arith.constant 0.000000e+00 : f32
    %0 = vector.broadcast %cst : f32 to vector<64x128xf32>
    %c0 = arith.constant 0 : index
    %c0_0 = arith.constant 0 : index
    %c0_1 = arith.constant 0 : index
    %c0_2 = arith.constant 0 : index
    %c0_3 = arith.constant 0 : index
    %1 = vector.load %arg1[%c0, %c0_0, %c0_1, %c0_2, %c0_3] : memref<1x4x9x9x4xbf16, #tpu.memory_space<vmem>>, vector<1x1x8x8x4xbf16>
    %2 = vector.shape_cast %1 : vector<1x1x8x8x4xbf16> to vector<8x8x4xbf16>
    %3 = vector.shape_cast %2 : vector<8x8x4xbf16> to vector<64x4xbf16>
    %c0_4 = arith.constant 0 : index
    %c0_5 = arith.constant 0 : index
    %c0_6 = arith.constant 0 : index
    %4 = vector.load %arg2[%c0_4, %c0_5, %c0_6] : memref<9x4x128xbf16, #tpu.memory_space<vmem>>, vector<1x4x128xbf16>
    %5 = vector.shape_cast %4 : vector<1x4x128xbf16> to vector<4x128xbf16>
    %cst_7 = arith.constant dense<0.000000e+00> : vector<64x128xf32>
    %6 = tpu.matmul %3, %5, %cst_7 {dimension_numbers = #tpu.dot_dimension_numbers<[1], [0], [0], [1], [0, 0, 1, 1], [], []>} : vector<64x4xbf16>, vector<4x128xbf16>, vector<64x128xf32> -> vector<64x128xf32>
    %7 = arith.addf %0, %6 : vector<64x128xf32>
    %c0_8 = arith.constant 0 : index
    %c1 = arith.constant 1 : index
    %c0_9 = arith.constant 0 : index
    %c0_10 = arith.constant 0 : index
    %c0_11 = arith.constant 0 : index
    %8 = vector.load %arg1[%c0_8, %c1, %c0_9, %c0_10, %c0_11] : memref<1x4x9x9x4xbf16, #tpu.memory_space<vmem>>, vector<1x1x8x8x4xbf16>
    %9 = vector.shape_cast %8 : vector<1x1x8x8x4xbf16> to vector<8x8x4xbf16>
    %10 = vector.shape_cast %9 : vector<8x8x4xbf16> to vector<64x4xbf16>
    %c1_12 = arith.constant 1 : index
    %c0_13 = arith.constant 0 : index
    %c0_14 = arith.constant 0 : index
    %11 = vector.load %arg2[%c1_12, %c0_13, %c0_14] : memref<9x4x128xbf16, #tpu.memory_space<vmem>>, vector<1x4x128xbf16>
    %12 = vector.shape_cast %11 : vector<1x4x128xbf16> to vector<4x128xbf16>
    %cst_15 = arith.constant dense<0.000000e+00> : vector<64x128xf32>
    %13 = tpu.matmul %10, %12, %cst_15 {dimension_numbers = #tpu.dot_dimension_numbers<[1], [0], [0], [1], [0, 0, 1, 1], [], []>} : vector<64x4xbf16>, vector<4x128xbf16>, vector<64x128xf32> -> vector<64x128xf32>
    %14 = arith.addf %7, %13 : vector<64x128xf32>
    %c0_16 = arith.constant 0 : index
    %c0_17 = arith.constant 0 : index
    %c0_18 = arith.constant 0 : index
    %c1_19 = arith.constant 1 : index
    %c0_20 = arith.constant 0 : index
    %15 = vector.load %arg1[%c0_16, %c0_17, %c0_18, %c1_19, %c0_20] : memref<1x4x9x9x4xbf16, #tpu.memory_space<vmem>>, vector<1x1x8x8x4xbf16>
    %16 = vector.shape_cast %15 : vector<1x1x8x8x4xbf16> to vector<8x8x4xbf16>
    %17 = vector.shape_cast %16 : vector<8x8x4xbf16> to vector<64x4xbf16>
    %c2 = arith.constant 2 : index
    %c0_21 = arith.constant 0 : index
    %c0_22 = arith.constant 0 : index
    %18 = vector.load %arg2[%c2, %c0_21, %c0_22] : memref<9x4x128xbf16, #tpu.memory_space<vmem>>, vector<1x4x128xbf16>
    %19 = vector.shape_cast %18 : vector<1x4x128xbf16> to vector<4x128xbf16>
    %cst_23 = arith.constant dense<0.000000e+00> : vector<64x128xf32>
    %20 = tpu.matmul %17, %19, %cst_23 {dimension_numbers = #tpu.dot_dimension_numbers<[1], [0], [0], [1], [0, 0, 1, 1], [], []>} : vector<64x4xbf16>, vector<4x128xbf16>, vector<64x128xf32> -> vector<64x128xf32>
    %21 = arith.addf %14, %20 : vector<64x128xf32>
    %c0_24 = arith.constant 0 : index
    %c2_25 = arith.constant 2 : index
    %c0_26 = arith.constant 0 : index
    %c0_27 = arith.constant 0 : index
    %c0_28 = arith.constant 0 : index
    %22 = vector.load %arg1[%c0_24, %c2_25, %c0_26, %c0_27, %c0_28] : memref<1x4x9x9x4xbf16, #tpu.memory_space<vmem>>, vector<1x1x8x8x4xbf16>
    %23 = vector.shape_cast %22 : vector<1x1x8x8x4xbf16> to vector<8x8x4xbf16>
    %24 = vector.shape_cast %23 : vector<8x8x4xbf16> to vector<64x4xbf16>
    %c3 = arith.constant 3 : index
    %c0_29 = arith.constant 0 : index
    %c0_30 = arith.constant 0 : index
    %25 = vector.load %arg2[%c3, %c0_29, %c0_30] : memref<9x4x128xbf16, #tpu.memory_space<vmem>>, vector<1x4x128xbf16>
    %26 = vector.shape_cast %25 : vector<1x4x128xbf16> to vector<4x128xbf16>
    %cst_31 = arith.constant dense<0.000000e+00> : vector<64x128xf32>
    %27 = tpu.matmul %24, %26, %cst_31 {dimension_numbers = #tpu.dot_dimension_numbers<[1], [0], [0], [1], [0, 0, 1, 1], [], []>} : vector<64x4xbf16>, vector<4x128xbf16>, vector<64x128xf32> -> vector<64x128xf32>
    %28 = arith.addf %21, %27 : vector<64x128xf32>
    %c0_32 = arith.constant 0 : index
    %c3_33 = arith.constant 3 : index
    %c0_34 = arith.constant 0 : index
    %c0_35 = arith.constant 0 : index
    %c0_36 = arith.constant 0 : index
    %29 = vector.load %arg1[%c0_32, %c3_33, %c0_34, %c0_35, %c0_36] : memref<1x4x9x9x4xbf16, #tpu.memory_space<vmem>>, vector<1x1x8x8x4xbf16>
    %30 = vector.shape_cast %29 : vector<1x1x8x8x4xbf16> to vector<8x8x4xbf16>
    %31 = vector.shape_cast %30 : vector<8x8x4xbf16> to vector<64x4xbf16>
    %c4 = arith.constant 4 : index
    %c0_37 = arith.constant 0 : index
    %c0_38 = arith.constant 0 : index
    %32 = vector.load %arg2[%c4, %c0_37, %c0_38] : memref<9x4x128xbf16, #tpu.memory_space<vmem>>, vector<1x4x128xbf16>
    %33 = vector.shape_cast %32 : vector<1x4x128xbf16> to vector<4x128xbf16>
    %cst_39 = arith.constant dense<0.000000e+00> : vector<64x128xf32>
    %34 = tpu.matmul %31, %33, %cst_39 {dimension_numbers = #tpu.dot_dimension_numbers<[1], [0], [0], [1], [0, 0, 1, 1], [], []>} : vector<64x4xbf16>, vector<4x128xbf16>, vector<64x128xf32> -> vector<64x128xf32>
    %35 = arith.addf %28, %34 : vector<64x128xf32>
    %c0_40 = arith.constant 0 : index
    %c2_41 = arith.constant 2 : index
    %c0_42 = arith.constant 0 : index
    %c1_43 = arith.constant 1 : index
    %c0_44 = arith.constant 0 : index
    %36 = vector.load %arg1[%c0_40, %c2_41, %c0_42, %c1_43, %c0_44] : memref<1x4x9x9x4xbf16, #tpu.memory_space<vmem>>, vector<1x1x8x8x4xbf16>
    %37 = vector.shape_cast %36 : vector<1x1x8x8x4xbf16> to vector<8x8x4xbf16>
    %38 = vector.shape_cast %37 : vector<8x8x4xbf16> to vector<64x4xbf16>
    %c5 = arith.constant 5 : index
    %c0_45 = arith.constant 0 : index
    %c0_46 = arith.constant 0 : index
    %39 = vector.load %arg2[%c5, %c0_45, %c0_46] : memref<9x4x128xbf16, #tpu.memory_space<vmem>>, vector<1x4x128xbf16>
    %40 = vector.shape_cast %39 : vector<1x4x128xbf16> to vector<4x128xbf16>
    %cst_47 = arith.constant dense<0.000000e+00> : vector<64x128xf32>
    %41 = tpu.matmul %38, %40, %cst_47 {dimension_numbers = #tpu.dot_dimension_numbers<[1], [0], [0], [1], [0, 0, 1, 1], [], []>} : vector<64x4xbf16>, vector<4x128xbf16>, vector<64x128xf32> -> vector<64x128xf32>
    %42 = arith.addf %35, %41 : vector<64x128xf32>
    %c0_48 = arith.constant 0 : index
    %c0_49 = arith.constant 0 : index
    %c1_50 = arith.constant 1 : index
    %c0_51 = arith.constant 0 : index
    %c0_52 = arith.constant 0 : index
    %43 = vector.load %arg1[%c0_48, %c0_49, %c1_50, %c0_51, %c0_52] : memref<1x4x9x9x4xbf16, #tpu.memory_space<vmem>>, vector<1x1x8x8x4xbf16>
    %44 = vector.shape_cast %43 : vector<1x1x8x8x4xbf16> to vector<8x8x4xbf16>
    %45 = vector.shape_cast %44 : vector<8x8x4xbf16> to vector<64x4xbf16>
    %c6 = arith.constant 6 : index
    %c0_53 = arith.constant 0 : index
    %c0_54 = arith.constant 0 : index
    %46 = vector.load %arg2[%c6, %c0_53, %c0_54] : memref<9x4x128xbf16, #tpu.memory_space<vmem>>, vector<1x4x128xbf16>
    %47 = vector.shape_cast %46 : vector<1x4x128xbf16> to vector<4x128xbf16>
    %cst_55 = arith.constant dense<0.000000e+00> : vector<64x128xf32>
    %48 = tpu.matmul %45, %47, %cst_55 {dimension_numbers = #tpu.dot_dimension_numbers<[1], [0], [0], [1], [0, 0, 1, 1], [], []>} : vector<64x4xbf16>, vector<4x128xbf16>, vector<64x128xf32> -> vector<64x128xf32>
    %49 = arith.addf %42, %48 : vector<64x128xf32>
    %c0_56 = arith.constant 0 : index
    %c1_57 = arith.constant 1 : index
    %c1_58 = arith.constant 1 : index
    %c0_59 = arith.constant 0 : index
    %c0_60 = arith.constant 0 : index
    %50 = vector.load %arg1[%c0_56, %c1_57, %c1_58, %c0_59, %c0_60] : memref<1x4x9x9x4xbf16, #tpu.memory_space<vmem>>, vector<1x1x8x8x4xbf16>
    %51 = vector.shape_cast %50 : vector<1x1x8x8x4xbf16> to vector<8x8x4xbf16>
    %52 = vector.shape_cast %51 : vector<8x8x4xbf16> to vector<64x4xbf16>
    %c7 = arith.constant 7 : index
    %c0_61 = arith.constant 0 : index
    %c0_62 = arith.constant 0 : index
    %53 = vector.load %arg2[%c7, %c0_61, %c0_62] : memref<9x4x128xbf16, #tpu.memory_space<vmem>>, vector<1x4x128xbf16>
    %54 = vector.shape_cast %53 : vector<1x4x128xbf16> to vector<4x128xbf16>
    %cst_63 = arith.constant dense<0.000000e+00> : vector<64x128xf32>
    %55 = tpu.matmul %52, %54, %cst_63 {dimension_numbers = #tpu.dot_dimension_numbers<[1], [0], [0], [1], [0, 0, 1, 1], [], []>} : vector<64x4xbf16>, vector<4x128xbf16>, vector<64x128xf32> -> vector<64x128xf32>
    %56 = arith.addf %49, %55 : vector<64x128xf32>
    %c0_64 = arith.constant 0 : index
    %c0_65 = arith.constant 0 : index
    %c1_66 = arith.constant 1 : index
    %c1_67 = arith.constant 1 : index
    %c0_68 = arith.constant 0 : index
    %57 = vector.load %arg1[%c0_64, %c0_65, %c1_66, %c1_67, %c0_68] : memref<1x4x9x9x4xbf16, #tpu.memory_space<vmem>>, vector<1x1x8x8x4xbf16>
    %58 = vector.shape_cast %57 : vector<1x1x8x8x4xbf16> to vector<8x8x4xbf16>
    %59 = vector.shape_cast %58 : vector<8x8x4xbf16> to vector<64x4xbf16>
    %c8 = arith.constant 8 : index
    %c0_69 = arith.constant 0 : index
    %c0_70 = arith.constant 0 : index
    %60 = vector.load %arg2[%c8, %c0_69, %c0_70] : memref<9x4x128xbf16, #tpu.memory_space<vmem>>, vector<1x4x128xbf16>
    %61 = vector.shape_cast %60 : vector<1x4x128xbf16> to vector<4x128xbf16>
    %cst_71 = arith.constant dense<0.000000e+00> : vector<64x128xf32>
    %62 = tpu.matmul %59, %61, %cst_71 {dimension_numbers = #tpu.dot_dimension_numbers<[1], [0], [0], [1], [0, 0, 1, 1], [], []>} : vector<64x4xbf16>, vector<4x128xbf16>, vector<64x128xf32> -> vector<64x128xf32>
    %63 = arith.addf %56, %62 : vector<64x128xf32>
    %64 = vector.shape_cast %63 : vector<64x128xf32> to vector<1x8x8x128xf32>
    %65 = arith.truncf %64 : vector<1x8x8x128xf32> to vector<1x8x8x128xbf16>
    %c0_72 = arith.constant 0 : index
    %c0_73 = arith.constant 0 : index
    %c0_74 = arith.constant 0 : index
    %c0_75 = arith.constant 0 : index
    %66 = vector.load %arg3[%c0_72, %c0_73, %c0_74, %c0_75] : memref<1x8x8x128xbf16, #tpu.memory_space<vmem>>, vector<1x8x8x128xbf16>
    tpu.vector_store %arg3[%c0_72, %c0_73, %c0_74, %c0_75], %65 {strides = array<i32>} : memref<1x8x8x128xbf16, #tpu.memory_space<vmem>>, vector<1x8x8x128xbf16>,
    %cst_76 = arith.constant dense<0.000000e+00> : vector<128xf32>
    %67 = vector.multi_reduction <add>, %63, %cst_76 [0] : vector<64x128xf32> to vector<128xf32>
    %68 = vector.shape_cast %67 : vector<128xf32> to vector<1x128xf32>
    %69 = arith.mulf %63, %63 : vector<64x128xf32>
    %cst_77 = arith.constant dense<0.000000e+00> : vector<128xf32>
    %70 = vector.multi_reduction <add>, %69, %cst_77 [0] : vector<64x128xf32> to vector<128xf32>
    %71 = vector.shape_cast %70 : vector<128xf32> to vector<1x128xf32>
    %cst_78 = arith.constant 0.000000e+00 : f32
    %72 = vector.broadcast %cst_78 : f32 to vector<6x128xf32>
    %73 = tpu.concatenate %68, %71, %72 in 0 : vector<1x128xf32>, vector<1x128xf32>, vector<6x128xf32> -> vector<8x128xf32>
    %c0_79 = arith.constant 0 : index
    %c0_80 = arith.constant 0 : index
    %74 = vector.load %arg4[%c0_79, %c0_80] : memref<8x128xf32, #tpu.memory_space<vmem>>, vector<8x128xf32>
    tpu.vector_store %arg4[%c0_79, %c0_80], %73 {strides = array<i32>} : memref<8x128xf32, #tpu.memory_space<vmem>>, vector<8x128xf32>,
    return
  }
  func.func @transform_0(%arg0: i32) -> (i32, i32, i32, i32, i32) {
    %c0_i32 = arith.constant 0 : i32
    %c0_i32_0 = arith.constant 0 : i32
    %c0_i32_1 = arith.constant 0 : i32
    %c0_i32_2 = arith.constant 0 : i32
    %c0_i32_3 = arith.constant 0 : i32
    return %arg0, %c0_i32, %c0_i32_0, %c0_i32_1, %c0_i32_2 : i32, i32, i32, i32, i32
  }
  func.func @transform_1(%arg0: i32) -> (i32, i32, i32) {
    %c0_i32 = arith.constant 0 : i32
    %c0_i32_0 = arith.constant 0 : i32
    %c0_i32_1 = arith.constant 0 : i32
    %c0_i32_2 = arith.constant 0 : i32
    return %c0_i32, %c0_i32_0, %c0_i32_1 : i32, i32, i32
  }
  func.func @transform_2(%arg0: i32) -> (i32, i32, i32, i32) {
    %c0_i32 = arith.constant 0 : i32
    %c0_i32_0 = arith.constant 0 : i32
    %c0_i32_1 = arith.constant 0 : i32
    %c0_i32_2 = arith.constant 0 : i32
    return %arg0, %c0_i32, %c0_i32_0, %c0_i32_1 : i32, i32, i32, i32
  }
  func.func @transform_3(%arg0: i32) -> (i32, i32) {
    %c0_i32 = arith.constant 0 : i32
    %c0_i32_0 = arith.constant 0 : i32
    return %arg0, %c0_i32 : i32, i32
  }
}

</mosaic_0001>

<llo_original>
// kernel: tpu_custom_call.1
$region0: #{tpu_custom_call.1}
  #allocation0 [shape = 'u32[]', space=smem, size = 0x4, offset = 0x4, fixed_abs, tag = 'smem constant byte address 0x4 - core index']
  #allocation1 [shape = 'u32[72,128]{1,0:T(1,128)}', space=vmem, size = 0x9000, scoped, tag = 'internal scratch']
  %s0 = inlined_call_operand.vmem [shape: bf16[2,4,9,9,4], index: 0, kind: input, shape index: {}]
  %s1 = inlined_call_operand.vmem [shape: bf16[9,4,128], index: 1, kind: input, shape index: {}]
  %s2 = inlined_call_operand.hbm [shape: bf16[2,8,8,128], index: 2, kind: output, shape index: {0}]
  %s3 = inlined_call_operand.hbm [shape: f32[16,128], index: 3, kind: output, shape index: {1}]
  %4 = xla_tuple %s2, %s3
  %s5 = sld [smem:[#allocation0]]
  $region49: #{tpu_custom_call.1} parent=0
    _
  %s7 = ssub.s32 1, %s5
  %s8 = scalar_select 0, %s7, %s5
  $region1: #{tpu_custom_call.1} parent=0
    #allocation2 [shape = 'u8[32768]{0}', space=vmem, size = 0x8000, scoped, tag = 'output window, operand 0']
    #allocation3 [shape = 's32[2]{0}', space=sflag, size = 0x8, scoped, tag = 'scoped memory for tpu_custom_call.1']
    #allocation4 [shape = 'u8[8192]{0}', space=vmem, size = 0x2000, scoped, tag = 'output window, operand 1']
    #allocation5 [shape = 's32[2]{0}', space=sflag, size = 0x8, scoped, tag = 'scoped memory for tpu_custom_call.1']
    %9 = vsyncpa [#allocation3], 0
    %s10 = scalar_lea.sflag [#allocation3], 1
    %11 = vsyncpa %s10, 0
    %12 = vsyncpa [#allocation5], 0
    %s13 = scalar_lea.sflag [#allocation5], 1
    %14 = vsyncpa %s13, 0
    loop: start=0, step=1, limit=4
    $region2: #{tpu_custom_call.1} parent=1 // loop_pre_header
      _
    $region3: #{tpu_custom_call.1} parent=1 // loop_header
      %s16 = sphi 0, %s20
      %p17 = scmp.ge.s32.totalorder %s16, 4
      %s26 = sphi 0, %s28
      %s29 = sphi 0, %s26
      %s30 = sphi 0, %s29
      %s46 = sphi 0, %s30
      %s50 = sphi 0, %s50
      %s52 = sphi 0, %s50
      %s53 = sphi 0, %s52
      %s67 = sphi 0, %s53
      %s73 = sphi 0, %s75
      %s76 = sphi 0, %s73
      %s77 = sphi 0, %s76
      %s93 = sphi 0, %s77
      %s99 = sphi 0, %s101
      %s102 = sphi 0, %s99
      %s103 = sphi 0, %s102
      %s119 = sphi 0, %s103
    $region4: #{tpu_custom_call.1} parent=1 // loop_header_branch
      %19 = sbr.rel (%p17) target = $region8
    $region5: #{tpu_custom_call.1} parent=1 // loop_body
      %s21 = ssub.s32 %s16, 1
      %s22 = ssub.s32 %s16, 2
      %s23 = sadd.s32 %s16, 1
      %s24 = ssub.s32 %s16, %s23
      %p25 = scmp.eq.s32.totalorder %s24, 0
      %s27 = sadd.s32 %s26, 1
      %s28 = scalar_select %p25, %s26, %s27
      %p31 = pneg %p25
      %p32 = scmp.eq.s32.totalorder %s16, 1
      %p33 = por %p31, %p32
      %p34 = scmp.ne.s32.totalorder %s26, %s29
      %p35 = scmp.eq.s32.totalorder %s16, 0
      %p36 = por %p34, %p35
      %p37 = scmp.ne.s32.totalorder %s26, %s29
      %p38 = scmp.eq.s32.totalorder %s21, 1
      %p39 = por %p37, %p38
      %p40 = scmp.ne.s32.totalorder %s29, %s30
      %p41 = scmp.eq.s32.totalorder %s21, 0
      %p42 = por %p40, %p41
      %p43 = scmp.ne.s32.totalorder %s29, %s30
      %p44 = scmp.eq.s32.totalorder %s22, 1
      %p45 = por %p43, %p44
      %p47 = scmp.ne.s32.totalorder %s30, %s46
      %p48 = scmp.eq.s32.totalorder %s22, 0
      %p49 = por %p47, %p48
      %s51 = sadd.s32 %s50, 1
      %p54 = scmp.eq.s32.totalorder %s16, 1
      %p55 = scmp.ne.s32.totalorder %s50, %s52
      %p56 = scmp.eq.s32.totalorder %s16, 0
      %p57 = por %p55, %p56
      %p58 = scmp.ne.s32.totalorder %s50, %s52
      %p59 = scmp.eq.s32.totalorder %s21, 1
      %p60 = por %p58, %p59
      %p61 = scmp.ne.s32.totalorder %s52, %s53
      %p62 = scmp.eq.s32.totalorder %s21, 0
      %p63 = por %p61, %p62
      %p64 = scmp.ne.s32.totalorder %s52, %s53
      %p65 = scmp.eq.s32.totalorder %s22, 1
      %p66 = por %p64, %p65
      %p68 = scmp.ne.s32.totalorder %s53, %s67
      %p69 = scmp.eq.s32.totalorder %s22, 0
      %p70 = por %p68, %p69
      %s71 = ssub.s32 %s16, %s23
      %p72 = scmp.eq.s32.totalorder %s71, 0
      %s74 = sadd.s32 %s73, 1
      %s75 = scalar_select %p72, %s73, %s74
      %p78 = pneg %p72
      %p79 = scmp.eq.s32.totalorder %s16, 1
      %p80 = por %p78, %p79
      %p81 = scmp.ne.s32.totalorder %s73, %s76
      %p82 = scmp.eq.s32.totalorder %s16, 0
      %p83 = por %p81, %p82
      %p84 = scmp.ne.s32.totalorder %s73, %s76
      %p85 = scmp.eq.s32.totalorder %s21, 1
      %p86 = por %p84, %p85
      %p87 = scmp.ne.s32.totalorder %s76, %s77
      %p88 = scmp.eq.s32.totalorder %s21, 0
      %p89 = por %p87, %p88
      %p90 = scmp.ne.s32.totalorder %s76, %s77
      %p91 = scmp.eq.s32.totalorder %s22, 1
      %p92 = por %p90, %p91
      %p94 = scmp.ne.s32.totalorder %s77, %s93
      %p95 = scmp.eq.s32.totalorder %s22, 0
      %p96 = por %p94, %p95
      %s97 = ssub.s32 %s16, %s23
      %p98 = scmp.eq.s32.totalorder %s97, 0
      %s100 = sadd.s32 %s99, 1
      %s101 = scalar_select %p98, %s99, %s100
      %p104 = pneg %p98
      %p105 = scmp.eq.s32.totalorder %s16, 1
      %p106 = por %p104, %p105
      %p107 = scmp.ne.s32.totalorder %s99, %s102
      %p108 = scmp.eq.s32.totalorder %s16, 0
      %p109 = por %p107, %p108
      %p110 = scmp.ne.s32.totalorder %s99, %s102
      %p111 = scmp.eq.s32.totalorder %s21, 1
      %p112 = por %p110, %p111
      %p113 = scmp.ne.s32.totalorder %s102, %s103
      %p114 = scmp.eq.s32.totalorder %s21, 0
      %p115 = por %p113, %p114
      %p116 = scmp.ne.s32.totalorder %s102, %s103
      %p117 = scmp.eq.s32.totalorder %s22, 1
      %p118 = por %p116, %p117
      %p120 = scmp.ne.s32.totalorder %s103, %s119
      %p121 = scmp.eq.s32.totalorder %s22, 0
      %p122 = por %p120, %p121
      %p123 = scmp.le.s32.totalorder 1, %s16
      %p124 = scmp.lt.s32.totalorder %s16, 3
      %p125 = pnand %p123, %p124
      %p126 = pneg %p125
      // Predicated region
      $region9: #{tpu_custom_call.1} parent=5 // pred_check
        _
      $region10: #{tpu_custom_call.1} parent=5 // pred_check_branch
        %128 = sbr.rel (%p125) target = $region12
      $region11: #{tpu_custom_call.1} parent=5 // pred_region
        %s129 = ssub.s32 %s16, 1
        // Predicated region
        $region13: #{tpu_custom_call.1} parent=11 // pred_check
          %p130 = pneg %p63
        $region14: #{tpu_custom_call.1} parent=11 // pred_check_branch
          %132 = sbr.rel (%p130) target = $region16
        $region15: #{tpu_custom_call.1} parent=11 // pred_region
          _
        $region16: #{tpu_custom_call.1} parent=11 // pred_fallthru
          _
      $region12: #{tpu_custom_call.1} parent=5 // pred_fallthru
        _
      %p133 = scmp.lt.s32.totalorder %s16, 2
      // Predicated region
      $region17: #{tpu_custom_call.1} parent=5 // pred_check
        %p134 = pneg %p133
      $region18: #{tpu_custom_call.1} parent=5 // pred_check_branch
        %136 = sbr.rel (%p134) target = $region20
      $region19: #{tpu_custom_call.1} parent=5 // pred_region
        // Predicated region
        $region21: #{tpu_custom_call.1} parent=19 // pred_check
          %p137 = pneg %p36
        $region22: #{tpu_custom_call.1} parent=19 // pred_check_branch
          %139 = sbr.rel (%p137) target = $region24
        $region23: #{tpu_custom_call.1} parent=19 // pred_region
          %p140 = scmp.lt.s32.totalorder %s16, 1
          %s141 = scalar_select %p140, %s16, 1
          %s142 = smul.addr %s141, 72
          %s143 = smul.addr %s142, 4
          %s144 = scalar_lea.vmem %s0, %s143
        $region24: #{tpu_custom_call.1} parent=19 // pred_fallthru
          _
      $region20: #{tpu_custom_call.1} parent=5 // pred_fallthru
        _
      %p145 = scmp.le.s32.totalorder 1, %s16
      %p146 = scmp.lt.s32.totalorder %s16, 3
      %p147 = pnand %p145, %p146
      %p148 = pneg %p147
      // Predicated region
      $region25: #{tpu_custom_call.1} parent=5 // pred_check
        _
      $region26: #{tpu_custom_call.1} parent=5 // pred_check_branch
        %150 = sbr.rel (%p147) target = $region28
      $region27: #{tpu_custom_call.1} parent=5 // pred_region
        %s151 = ssub.s32 %s16, 1
        %p152 = scmp.lt.s32.totalorder %s21, 1
        %s153 = scalar_select %p152, %s21, 1
        %s154 = smul.addr %s153, 72
        %s155 = smul.addr %s154, 4
        %s156 = scalar_lea.vmem %s0, %s155
        %p157 = pneg %p42
        %p158 = pneg %p39
        %p159 = pneg %p63
        %p160 = pneg %p60
        %p161 = pneg %p89
        %p162 = pneg %p86
        %s163 = sand.u32 %s76, 1
        %s164 = scalar_lea.sflag [#allocation3], %s163
        %s165 = sand.u32 %s76, 1
        %s166 = smul.addr %s165, 32
        %s167 = scalar_lea.vmem [#allocation2], %s166
        %p168 = pneg %p115
        %p169 = pneg %p112
        %s170 = sand.u32 %s102, 1
        %s171 = scalar_lea.sflag [#allocation5], %s170
        %s172 = sand.u32 %s102, 1
        %s173 = smul.addr %s172, 8
        %s174 = scalar_lea.vmem [#allocation4], %s173
        %p175 = scmp.lt.s32.totalorder %s21, 1
        %s176 = scalar_select %p175, %s21, 1
        %s177 = smul.addr %s176, 72
        %s178 = smul.addr %s177, 4
        %s179 = scalar_lea.vmem %s0, %s178
        %v181 = vld [vmem:[%s179] sm:$0xf]
        %v182 = vld [vmem:[%s179 + $0x8] sm:$0xf]
        %v183 = vld [vmem:[%s179 + $0x10] sm:$0xf]
        %v184 = vld [vmem:[%s179 + $0x18] sm:$0xf]
        %v185 = vld [vmem:[%s179 + $0x20] sm:$0xf]
        %v186 = vld [vmem:[%s179 + $0x28] sm:$0xf]
        %v187 = vld [vmem:[%s179 + $0x30] sm:$0xf]
        %v188 = vld [vmem:[%s179 + $0x38] sm:$0xf]
        %v189 = vld [vmem:[%s1] sm:$0x3]
        %s190 = scalar_lea.vmem %s179, 72
        %v191 = vld [vmem:[%s190] sm:$0xf]
        %v192 = vld [vmem:[%s190 + $0x8] sm:$0xf]
        %v193 = vld [vmem:[%s190 + $0x10] sm:$0xf]
        %v194 = vld [vmem:[%s190 + $0x18] sm:$0xf]
        %v195 = vld [vmem:[%s190 + $0x20] sm:$0xf]
        %v196 = vld [vmem:[%s190 + $0x28] sm:$0xf]
        %v197 = vld [vmem:[%s190 + $0x30] sm:$0xf]
        %v198 = vld [vmem:[%s190 + $0x38] sm:$0xf]
        %s199 = scalar_lea.vmem %s1, 2
        %v200 = vld [vmem:[%s199] sm:$0x3]
        %v209 = vunpack.c.l.b16 %v191
        %v210 = vunpack.c.l.b16 %v192
        %v211 = vunpack.c.l.b16 %v193
        %v212 = vunpack.c.l.b16 %v194
        %v213 = vunpack.c.l.b16 %v195
        %v214 = vunpack.c.l.b16 %v196
        %v215 = vunpack.c.l.b16 %v197
        %v216 = vunpack.c.l.b16 %v198
        %v217 = vpack.c.b16 %v210, %v209
        %v218 = vpack.c.b16 %v212, %v211
        %v219 = vpack.c.b16 %v214, %v213
        %v220 = vpack.c.b16 %v216, %v215
        %vm221 = vcmask 31744
        %v223 = vsel %vm221, %v217, 0
        %v226 = vsel %vm221, %v218, 0
        %v229 = vsel %vm221, %v219, 0
        %v232 = vsel %vm221, %v220, 0
        %vm234 = vcmask 1041408
        %v236 = vsel %vm234, %v200, 0
        %238 = vmatpush.bf16.msra.mxu0 0
        %239 = vmatpush.bf16.msra.mxu0 0
        %240 = vmatpush.bf16.msra.mxu0 0
        %241 = vmatpush.bf16.msra.mxu0 0
        %242 = vmatpush.bf16.msra.mxu0 0
        %243 = vmatpush.bf16.msra.mxu0 0
        %244 = vmatpush.bf16.msra.mxu0 0
        %245 = vmatpush.bf16.msra.mxu0 %v236
        %246 = vmatmul.bf16.gmra.mxu0 %v223
        %v247 = vpop.f32.mrf.mxu0
        %v248 = vadd.f32 0.0, %v247
        %v249 = vpop.f32.mrf.mxu0
        %v250 = vadd.f32 0.0, %v249
        %251 = vmatmul.bf16.gmra.mxu0 %v226
        %v252 = vpop.f32.mrf.mxu0
        %v253 = vadd.f32 0.0, %v252
        %v254 = vpop.f32.mrf.mxu0
        %v255 = vadd.f32 0.0, %v254
        %256 = vmatmul.bf16.gmra.mxu0 %v229
        %v257 = vpop.f32.mrf.mxu0
        %v258 = vadd.f32 0.0, %v257
        %v259 = vpop.f32.mrf.mxu0
        %v260 = vadd.f32 0.0, %v259
        %261 = vmatmul.bf16.gmra.mxu0 %v232
        %v262 = vpop.f32.mrf.mxu0
        %v263 = vadd.f32 0.0, %v262
        %v264 = vpop.f32.mrf.mxu0
        %v265 = vadd.f32 0.0, %v264
        %266 = vdwg.mxu0
        %v275 = vunpack.c.l.b16 %v181
        %v276 = vunpack.c.l.b16 %v182
        %v277 = vunpack.c.l.b16 %v183
        %v278 = vunpack.c.l.b16 %v184
        %v279 = vunpack.c.l.b16 %v185
        %v280 = vunpack.c.l.b16 %v186
        %v281 = vunpack.c.l.b16 %v187
        %v282 = vunpack.c.l.b16 %v188
        %v283 = vpack.c.b16 %v276, %v275
        %v284 = vpack.c.b16 %v278, %v277
        %v285 = vpack.c.b16 %v280, %v279
        %v286 = vpack.c.b16 %v282, %v281
        %v288 = vsel %vm221, %v283, 0
        %v291 = vsel %vm221, %v284, 0
        %v294 = vsel %vm221, %v285, 0
        %v297 = vsel %vm221, %v286, 0
        %v300 = vsel %vm234, %v189, 0
        %302 = vmatpush.bf16.msra.mxu0 0
        %303 = vmatpush.bf16.msra.mxu0 0
        %304 = vmatpush.bf16.msra.mxu0 0
        %305 = vmatpush.bf16.msra.mxu0 0
        %306 = vmatpush.bf16.msra.mxu0 0
        %307 = vmatpush.bf16.msra.mxu0 0
        %308 = vmatpush.bf16.msra.mxu0 0
        %309 = vmatpush.bf16.msra.mxu0 %v300
        %310 = vmatmul.bf16.gmra.mxu0 %v288
        %v311 = vpop.f32.mrf.mxu0
        %v312 = vadd.f32 %v248, %v311
        %v313 = vpop.f32.mrf.mxu0
        %v314 = vadd.f32 %v250, %v313
        %315 = vmatmul.bf16.gmra.mxu0 %v291
        %v316 = vpop.f32.mrf.mxu0
        %v317 = vadd.f32 %v253, %v316
        %v318 = vpop.f32.mrf.mxu0
        %v319 = vadd.f32 %v255, %v318
        %320 = vmatmul.bf16.gmra.mxu0 %v294
        %v321 = vpop.f32.mrf.mxu0
        %v322 = vadd.f32 %v258, %v321
        %v323 = vpop.f32.mrf.mxu0
        %v324 = vadd.f32 %v260, %v323
        %325 = vmatmul.bf16.gmra.mxu0 %v297
        %v326 = vpop.f32.mrf.mxu0
        %v327 = vadd.f32 %v263, %v326
        %v328 = vpop.f32.mrf.mxu0
        %v329 = vadd.f32 %v265, %v328
        %330 = vdwg.mxu0
        %v331 = vld [vmem:[%s179] sm:$0xf]
        %v332 = vld [vmem:[%s179 + $0x4] sm:$0x1]
        %v333 = vld [vmem:[%s179 + $0x8] sm:$0xf]
        %v334 = vld [vmem:[%s179 + $0xc] sm:$0x1]
        %v335 = vld [vmem:[%s179 + $0x10] sm:$0xf]
        %v336 = vld [vmem:[%s179 + $0x14] sm:$0x1]
        %v337 = vld [vmem:[%s179 + $0x18] sm:$0xf]
        %v338 = vld [vmem:[%s179 + $0x1c] sm:$0x1]
        %v339 = vld [vmem:[%s179 + $0x20] sm:$0xf]
        %v340 = vld [vmem:[%s179 + $0x24] sm:$0x1]
        %v341 = vld [vmem:[%s179 + $0x28] sm:$0xf]
        %v342 = vld [vmem:[%s179 + $0x2c] sm:$0x1]
        %v343 = vld [vmem:[%s179 + $0x30] sm:$0xf]
        %v344 = vld [vmem:[%s179 + $0x34] sm:$0x1]
        %v345 = vld [vmem:[%s179 + $0x38] sm:$0xf]
        %v346 = vld [vmem:[%s179 + $0x3c] sm:$0x1]
        %vm347 = vsmask.f32 3328
        %vm348 = vsmask.f32 7440
        %vm349 = vmor %vm347, %vm348
        %v351 = vshrl.u32 %v331, 16
        %v353 = vrot.slane %v351, 4
        %v354 = vshll.u32 %v331, 16
        %v356 = vrot.slane %v354, 5
        %v357 = vor.u32 %v353, %v356
        %v358 = vrot.slane %v357, 4
        %v360 = vshll.u32 %v332, 16
        %v362 = vrot.slane %v360, 5
        %v363 = vsel %vm349, %v358, %v362
        %v365 = vshrl.u32 %v333, 16
        %v367 = vrot.slane %v365, 4
        %v368 = vshll.u32 %v333, 16
        %v370 = vrot.slane %v368, 5
        %v371 = vor.u32 %v367, %v370
        %v372 = vrot.slane %v371, 4
        %v374 = vshll.u32 %v334, 16
        %v376 = vrot.slane %v374, 5
        %v377 = vsel %vm349, %v372, %v376
        %v379 = vshrl.u32 %v335, 16
        %v381 = vrot.slane %v379, 4
        %v382 = vshll.u32 %v335, 16
        %v384 = vrot.slane %v382, 5
        %v385 = vor.u32 %v381, %v384
        %v386 = vrot.slane %v385, 4
        %v388 = vshll.u32 %v336, 16
        %v390 = vrot.slane %v388, 5
        %v391 = vsel %vm349, %v386, %v390
        %v393 = vshrl.u32 %v337, 16
        %v395 = vrot.slane %v393, 4
        %v396 = vshll.u32 %v337, 16
        %v398 = vrot.slane %v396, 5
        %v399 = vor.u32 %v395, %v398
        %v400 = vrot.slane %v399, 4
        %v402 = vshll.u32 %v338, 16
        %v404 = vrot.slane %v402, 5
        %v405 = vsel %vm349, %v400, %v404
        %v407 = vshrl.u32 %v339, 16
        %v409 = vrot.slane %v407, 4
        %v410 = vshll.u32 %v339, 16
        %v412 = vrot.slane %v410, 5
        %v413 = vor.u32 %v409, %v412
        %v414 = vrot.slane %v413, 4
        %v416 = vshll.u32 %v340, 16
        %v418 = vrot.slane %v416, 5
        %v419 = vsel %vm349, %v414, %v418
        %v421 = vshrl.u32 %v341, 16
        %v423 = vrot.slane %v421, 4
        %v424 = vshll.u32 %v341, 16
        %v426 = vrot.slane %v424, 5
        %v427 = vor.u32 %v423, %v426
        %v428 = vrot.slane %v427, 4
        %v430 = vshll.u32 %v342, 16
        %v432 = vrot.slane %v430, 5
        %v433 = vsel %vm349, %v428, %v432
        %v435 = vshrl.u32 %v343, 16
        %v437 = vrot.slane %v435, 4
        %v438 = vshll.u32 %v343, 16
        %v440 = vrot.slane %v438, 5
        %v441 = vor.u32 %v437, %v440
        %v442 = vrot.slane %v441, 4
        %v444 = vshll.u32 %v344, 16
        %v446 = vrot.slane %v444, 5
        %v447 = vsel %vm349, %v442, %v446
        %v449 = vshrl.u32 %v345, 16
        %v451 = vrot.slane %v449, 4
        %v452 = vshll.u32 %v345, 16
        %v454 = vrot.slane %v452, 5
        %v455 = vor.u32 %v451, %v454
        %v456 = vrot.slane %v455, 4
        %v458 = vshll.u32 %v346, 16
        %v460 = vrot.slane %v458, 5
        %v461 = vsel %vm349, %v456, %v460
        %s462 = scalar_lea.vmem %s1, 4
        %v463 = vld [vmem:[%s462] sm:$0x3]
        %v464 = vunpack.c.l.b16 %v363
        %v465 = vunpack.c.l.b16 %v377
        %v466 = vunpack.c.l.b16 %v391
        %v467 = vunpack.c.l.b16 %v405
        %v468 = vunpack.c.l.b16 %v419
        %v469 = vunpack.c.l.b16 %v433
        %v470 = vunpack.c.l.b16 %v447
        %v471 = vunpack.c.l.b16 %v461
        %v472 = vpack.c.b16 %v465, %v464
        %v473 = vpack.c.b16 %v467, %v466
        %v474 = vpack.c.b16 %v469, %v468
        %v475 = vpack.c.b16 %v471, %v470
        %v477 = vsel %vm221, %v472, 0
        %v480 = vsel %vm221, %v473, 0
        %v483 = vsel %vm221, %v474, 0
        %v486 = vsel %vm221, %v475, 0
        %v489 = vsel %vm234, %v463, 0
        %491 = vmatpush.bf16.msra.mxu0 0
        %492 = vmatpush.bf16.msra.mxu0 0
        %493 = vmatpush.bf16.msra.mxu0 0
        %494 = vmatpush.bf16.msra.mxu0 0
        %495 = vmatpush.bf16.msra.mxu0 0
        %496 = vmatpush.bf16.msra.mxu0 0
        %497 = vmatpush.bf16.msra.mxu0 0
        %498 = vmatpush.bf16.msra.mxu0 %v489
        %499 = vmatmul.bf16.gmra.mxu0 %v477
        %v500 = vpop.f32.mrf.mxu0
        %v501 = vadd.f32 0.0, %v500
        %v502 = vpop.f32.mrf.mxu0
        %v503 = vadd.f32 0.0, %v502
        %504 = vmatmul.bf16.gmra.mxu0 %v480
        %v505 = vpop.f32.mrf.mxu0
        %v506 = vadd.f32 0.0, %v505
        %v507 = vpop.f32.mrf.mxu0
        %v508 = vadd.f32 0.0, %v507
        %509 = vmatmul.bf16.gmra.mxu0 %v483
        %v510 = vpop.f32.mrf.mxu0
        %v511 = vadd.f32 0.0, %v510
        %v512 = vpop.f32.mrf.mxu0
        %v513 = vadd.f32 0.0, %v512
        %514 = vmatmul.bf16.gmra.mxu0 %v486
        %v515 = vpop.f32.mrf.mxu0
        %v516 = vadd.f32 0.0, %v515
        %v517 = vpop.f32.mrf.mxu0
        %v518 = vadd.f32 0.0, %v517
        %519 = vdwg.mxu0
        %v520 = vadd.f32 %v312, %v501
        %v521 = vadd.f32 %v314, %v503
        %v522 = vadd.f32 %v317, %v506
        %v523 = vadd.f32 %v319, %v508
        %v524 = vadd.f32 %v322, %v511
        %v525 = vadd.f32 %v324, %v513
        %v526 = vadd.f32 %v327, %v516
        %v527 = vadd.f32 %v329, %v518
        %s528 = scalar_lea.vmem %s179, 144
        %v529 = vld [vmem:[%s528] sm:$0xf]
        %v530 = vld [vmem:[%s528 + $0x8] sm:$0xf]
        %v531 = vld [vmem:[%s528 + $0x10] sm:$0xf]
        %v532 = vld [vmem:[%s528 + $0x18] sm:$0xf]
        %v533 = vld [vmem:[%s528 + $0x20] sm:$0xf]
        %v534 = vld [vmem:[%s528 + $0x28] sm:$0xf]
        %v535 = vld [vmem:[%s528 + $0x30] sm:$0xf]
        %v536 = vld [vmem:[%s528 + $0x38] sm:$0xf]
        %s537 = scalar_lea.vmem %s1, 6
        %v538 = vld [vmem:[%s537] sm:$0x3]
        %v547 = vunpack.c.l.b16 %v529
        %v548 = vunpack.c.l.b16 %v530
        %v549 = vunpack.c.l.b16 %v531
        %v550 = vunpack.c.l.b16 %v532
        %v551 = vunpack.c.l.b16 %v533
        %v552 = vunpack.c.l.b16 %v534
        %v553 = vunpack.c.l.b16 %v535
        %v554 = vunpack.c.l.b16 %v536
        %v555 = vpack.c.b16 %v548, %v547
        %v556 = vpack.c.b16 %v550, %v549
        %v557 = vpack.c.b16 %v552, %v551
        %v558 = vpack.c.b16 %v554, %v553
        %v560 = vsel %vm221, %v555, 0
        %v563 = vsel %vm221, %v556, 0
        %v566 = vsel %vm221, %v557, 0
        %v569 = vsel %vm221, %v558, 0
        %v572 = vsel %vm234, %v538, 0
        %574 = vmatpush.bf16.msra.mxu0 0
        %575 = vmatpush.bf16.msra.mxu0 0
        %576 = vmatpush.bf16.msra.mxu0 0
        %577 = vmatpush.bf16.msra.mxu0 0
        %578 = vmatpush.bf16.msra.mxu0 0
        %579 = vmatpush.bf16.msra.mxu0 0
        %580 = vmatpush.bf16.msra.mxu0 0
        %581 = vmatpush.bf16.msra.mxu0 %v572
        %582 = vmatmul.bf16.gmra.mxu0 %v560
        %v583 = vpop.f32.mrf.mxu0
        %v584 = vadd.f32 0.0, %v583
        %v585 = vpop.f32.mrf.mxu0
        %v586 = vadd.f32 0.0, %v585
        %587 = vmatmul.bf16.gmra.mxu0 %v563
        %v588 = vpop.f32.mrf.mxu0
        %v589 = vadd.f32 0.0, %v588
        %v590 = vpop.f32.mrf.mxu0
        %v591 = vadd.f32 0.0, %v590
        %592 = vmatmul.bf16.gmra.mxu0 %v566
        %v593 = vpop.f32.mrf.mxu0
        %v594 = vadd.f32 0.0, %v593
        %v595 = vpop.f32.mrf.mxu0
        %v596 = vadd.f32 0.0, %v595
        %597 = vmatmul.bf16.gmra.mxu0 %v569
        %v598 = vpop.f32.mrf.mxu0
        %v599 = vadd.f32 0.0, %v598
        %v600 = vpop.f32.mrf.mxu0
        %v601 = vadd.f32 0.0, %v600
        %602 = vdwg.mxu0
        %v603 = vadd.f32 %v520, %v584
        %v604 = vadd.f32 %v521, %v586
        %v605 = vadd.f32 %v522, %v589
        %v606 = vadd.f32 %v523, %v591
        %v607 = vadd.f32 %v524, %v594
        %v608 = vadd.f32 %v525, %v596
        %v609 = vadd.f32 %v526, %v599
        %v610 = vadd.f32 %v527, %v601
        %s611 = scalar_lea.vmem %s179, 216
        %v612 = vld [vmem:[%s611] sm:$0xf]
        %v613 = vld [vmem:[%s611 + $0x8] sm:$0xf]
        %v614 = vld [vmem:[%s611 + $0x10] sm:$0xf]
        %v615 = vld [vmem:[%s611 + $0x18] sm:$0xf]
        %v616 = vld [vmem:[%s611 + $0x20] sm:$0xf]
        %v617 = vld [vmem:[%s611 + $0x28] sm:$0xf]
        %v618 = vld [vmem:[%s611 + $0x30] sm:$0xf]
        %v619 = vld [vmem:[%s611 + $0x38] sm:$0xf]
        %s620 = scalar_lea.vmem %s1, 8
        %v621 = vld [vmem:[%s620] sm:$0x3]
        %v630 = vunpack.c.l.b16 %v612
        %v631 = vunpack.c.l.b16 %v613
        %v632 = vunpack.c.l.b16 %v614
        %v633 = vunpack.c.l.b16 %v615
        %v634 = vunpack.c.l.b16 %v616
        %v635 = vunpack.c.l.b16 %v617
        %v636 = vunpack.c.l.b16 %v618
        %v637 = vunpack.c.l.b16 %v619
        %v638 = vpack.c.b16 %v631, %v630
        %v639 = vpack.c.b16 %v633, %v632
        %v640 = vpack.c.b16 %v635, %v634
        %v641 = vpack.c.b16 %v637, %v636
        %v643 = vsel %vm221, %v638, 0
        %v646 = vsel %vm221, %v639, 0
        %v649 = vsel %vm221, %v640, 0
        %v652 = vsel %vm221, %v641, 0
        %v655 = vsel %vm234, %v621, 0
        %657 = vmatpush.bf16.msra.mxu0 0
        %658 = vmatpush.bf16.msra.mxu0 0
        %659 = vmatpush.bf16.msra.mxu0 0
        %660 = vmatpush.bf16.msra.mxu0 0
        %661 = vmatpush.bf16.msra.mxu0 0
        %662 = vmatpush.bf16.msra.mxu0 0
        %663 = vmatpush.bf16.msra.mxu0 0
        %664 = vmatpush.bf16.msra.mxu0 %v655
        %665 = vmatmul.bf16.gmra.mxu0 %v643
        %v666 = vpop.f32.mrf.mxu0
        %v667 = vadd.f32 0.0, %v666
        %v668 = vpop.f32.mrf.mxu0
        %v669 = vadd.f32 0.0, %v668
        %670 = vmatmul.bf16.gmra.mxu0 %v646
        %v671 = vpop.f32.mrf.mxu0
        %v672 = vadd.f32 0.0, %v671
        %v673 = vpop.f32.mrf.mxu0
        %v674 = vadd.f32 0.0, %v673
        %675 = vmatmul.bf16.gmra.mxu0 %v649
        %v676 = vpop.f32.mrf.mxu0
        %v677 = vadd.f32 0.0, %v676
        %v678 = vpop.f32.mrf.mxu0
        %v679 = vadd.f32 0.0, %v678
        %680 = vmatmul.bf16.gmra.mxu0 %v652
        %v681 = vpop.f32.mrf.mxu0
        %v682 = vadd.f32 0.0, %v681
        %v683 = vpop.f32.mrf.mxu0
        %v684 = vadd.f32 0.0, %v683
        %685 = vdwg.mxu0
        %v686 = vadd.f32 %v603, %v667
        %v687 = vadd.f32 %v604, %v669
        %v688 = vadd.f32 %v605, %v672
        %v689 = vadd.f32 %v606, %v674
        %v690 = vadd.f32 %v607, %v677
        %v691 = vadd.f32 %v608, %v679
        %v692 = vadd.f32 %v609, %v682
        %v693 = vadd.f32 %v610, %v684
        %v694 = vld [vmem:[%s528] sm:$0xf]
        %v695 = vld [vmem:[%s528 + $0x4] sm:$0x1]
        %v696 = vld [vmem:[%s528 + $0x8] sm:$0xf]
        %v697 = vld [vmem:[%s528 + $0xc] sm:$0x1]
        %v698 = vld [vmem:[%s528 + $0x10] sm:$0xf]
        %v699 = vld [vmem:[%s528 + $0x14] sm:$0x1]
        %v700 = vld [vmem:[%s528 + $0x18] sm:$0xf]
        %v701 = vld [vmem:[%s528 + $0x1c] sm:$0x1]
        %v702 = vld [vmem:[%s528 + $0x20] sm:$0xf]
        %v703 = vld [vmem:[%s528 + $0x24] sm:$0x1]
        %v704 = vld [vmem:[%s528 + $0x28] sm:$0xf]
        %v705 = vld [vmem:[%s528 + $0x2c] sm:$0x1]
        %v706 = vld [vmem:[%s528 + $0x30] sm:$0xf]
        %v707 = vld [vmem:[%s528 + $0x34] sm:$0x1]
        %v708 = vld [vmem:[%s528 + $0x38] sm:$0xf]
        %v709 = vld [vmem:[%s528 + $0x3c] sm:$0x1]
        %v711 = vshrl.u32 %v694, 16
        %v713 = vrot.slane %v711, 4
        %v714 = vshll.u32 %v694, 16
        %v716 = vrot.slane %v714, 5
        %v717 = vor.u32 %v713, %v716
        %v718 = vrot.slane %v717, 4
        %v720 = vshll.u32 %v695, 16
        %v722 = vrot.slane %v720, 5
        %v723 = vsel %vm349, %v718, %v722
        %v725 = vshrl.u32 %v696, 16
        %v727 = vrot.slane %v725, 4
        %v728 = vshll.u32 %v696, 16
        %v730 = vrot.slane %v728, 5
        %v731 = vor.u32 %v727, %v730
        %v732 = vrot.slane %v731, 4
        %v734 = vshll.u32 %v697, 16
        %v736 = vrot.slane %v734, 5
        %v737 = vsel %vm349, %v732, %v736
        %v739 = vshrl.u32 %v698, 16
        %v741 = vrot.slane %v739, 4
        %v742 = vshll.u32 %v698, 16
        %v744 = vrot.slane %v742, 5
        %v745 = vor.u32 %v741, %v744
        %v746 = vrot.slane %v745, 4
        %v748 = vshll.u32 %v699, 16
        %v750 = vrot.slane %v748, 5
        %v751 = vsel %vm349, %v746, %v750
        %v753 = vshrl.u32 %v700, 16
        %v755 = vrot.slane %v753, 4
        %v756 = vshll.u32 %v700, 16
        %v758 = vrot.slane %v756, 5
        %v759 = vor.u32 %v755, %v758
        %v760 = vrot.slane %v759, 4
        %v762 = vshll.u32 %v701, 16
        %v764 = vrot.slane %v762, 5
        %v765 = vsel %vm349, %v760, %v764
        %v767 = vshrl.u32 %v702, 16
        %v769 = vrot.slane %v767, 4
        %v770 = vshll.u32 %v702, 16
        %v772 = vrot.slane %v770, 5
        %v773 = vor.u32 %v769, %v772
        %v774 = vrot.slane %v773, 4
        %v776 = vshll.u32 %v703, 16
        %v778 = vrot.slane %v776, 5
        %v779 = vsel %vm349, %v774, %v778
        %v781 = vshrl.u32 %v704, 16
        %v783 = vrot.slane %v781, 4
        %v784 = vshll.u32 %v704, 16
        %v786 = vrot.slane %v784, 5
        %v787 = vor.u32 %v783, %v786
        %v788 = vrot.slane %v787, 4
        %v790 = vshll.u32 %v705, 16
        %v792 = vrot.slane %v790, 5
        %v793 = vsel %vm349, %v788, %v792
        %v795 = vshrl.u32 %v706, 16
        %v797 = vrot.slane %v795, 4
        %v798 = vshll.u32 %v706, 16
        %v800 = vrot.slane %v798, 5
        %v801 = vor.u32 %v797, %v800
        %v802 = vrot.slane %v801, 4
        %v804 = vshll.u32 %v707, 16
        %v806 = vrot.slane %v804, 5
        %v807 = vsel %vm349, %v802, %v806
        %v809 = vshrl.u32 %v708, 16
        %v811 = vrot.slane %v809, 4
        %v812 = vshll.u32 %v708, 16
        %v814 = vrot.slane %v812, 5
        %v815 = vor.u32 %v811, %v814
        %v816 = vrot.slane %v815, 4
        %v818 = vshll.u32 %v709, 16
        %v820 = vrot.slane %v818, 5
        %v821 = vsel %vm349, %v816, %v820
        %s822 = scalar_lea.vmem %s1, 10
        %v823 = vld [vmem:[%s822] sm:$0x3]
        %v824 = vunpack.c.l.b16 %v723
        %v825 = vunpack.c.l.b16 %v737
        %v826 = vunpack.c.l.b16 %v751
        %v827 = vunpack.c.l.b16 %v765
        %v828 = vunpack.c.l.b16 %v779
        %v829 = vunpack.c.l.b16 %v793
        %v830 = vunpack.c.l.b16 %v807
        %v831 = vunpack.c.l.b16 %v821
        %v832 = vpack.c.b16 %v825, %v824
        %v833 = vpack.c.b16 %v827, %v826
        %v834 = vpack.c.b16 %v829, %v828
        %v835 = vpack.c.b16 %v831, %v830
        %v837 = vsel %vm221, %v832, 0
        %v840 = vsel %vm221, %v833, 0
        %v843 = vsel %vm221, %v834, 0
        %v846 = vsel %vm221, %v835, 0
        %v849 = vsel %vm234, %v823, 0
        %851 = vmatpush.bf16.msra.mxu0 0
        %852 = vmatpush.bf16.msra.mxu0 0
        %853 = vmatpush.bf16.msra.mxu0 0
        %854 = vmatpush.bf16.msra.mxu0 0
        %855 = vmatpush.bf16.msra.mxu0 0
        %856 = vmatpush.bf16.msra.mxu0 0
        %857 = vmatpush.bf16.msra.mxu0 0
        %858 = vmatpush.bf16.msra.mxu0 %v849
        %859 = vmatmul.bf16.gmra.mxu0 %v837
        %v860 = vpop.f32.mrf.mxu0
        %v861 = vadd.f32 0.0, %v860
        %v862 = vpop.f32.mrf.mxu0
        %v863 = vadd.f32 0.0, %v862
        %864 = vmatmul.bf16.gmra.mxu0 %v840
        %v865 = vpop.f32.mrf.mxu0
        %v866 = vadd.f32 0.0, %v865
        %v867 = vpop.f32.mrf.mxu0
        %v868 = vadd.f32 0.0, %v867
        %869 = vmatmul.bf16.gmra.mxu0 %v843
        %v870 = vpop.f32.mrf.mxu0
        %v871 = vadd.f32 0.0, %v870
        %v872 = vpop.f32.mrf.mxu0
        %v873 = vadd.f32 0.0, %v872
        %874 = vmatmul.bf16.gmra.mxu0 %v846
        %v875 = vpop.f32.mrf.mxu0
        %v876 = vadd.f32 0.0, %v875
        %v877 = vpop.f32.mrf.mxu0
        %v878 = vadd.f32 0.0, %v877
        %879 = vdwg.mxu0
        %v880 = vadd.f32 %v686, %v861
        %v881 = vadd.f32 %v687, %v863
        %v882 = vadd.f32 %v688, %v866
        %v883 = vadd.f32 %v689, %v868
        %v884 = vadd.f32 %v690, %v871
        %v885 = vadd.f32 %v691, %v873
        %v886 = vadd.f32 %v692, %v876
        %v887 = vadd.f32 %v693, %v878
        %s888 = scalar_lea.vmem %s179, 8
        %v889 = vld [vmem:[%s888] sm:$0xf]
        %v890 = vld [vmem:[%s888 + $0x8] sm:$0xf]
        %v891 = vld [vmem:[%s888 + $0x10] sm:$0xf]
        %v892 = vld [vmem:[%s888 + $0x18] sm:$0xf]
        %v893 = vld [vmem:[%s888 + $0x20] sm:$0xf]
        %v894 = vld [vmem:[%s888 + $0x28] sm:$0xf]
        %v895 = vld [vmem:[%s888 + $0x30] sm:$0xf]
        %v896 = vld [vmem:[%s888 + $0x38] sm:$0xf]
        %s897 = scalar_lea.vmem %s1, 12
        %v898 = vld [vmem:[%s897] sm:$0x3]
        %v907 = vunpack.c.l.b16 %v889
        %v908 = vunpack.c.l.b16 %v890
        %v909 = vunpack.c.l.b16 %v891
        %v910 = vunpack.c.l.b16 %v892
        %v911 = vunpack.c.l.b16 %v893
        %v912 = vunpack.c.l.b16 %v894
        %v913 = vunpack.c.l.b16 %v895
        %v914 = vunpack.c.l.b16 %v896
        %v915 = vpack.c.b16 %v908, %v907
        %v916 = vpack.c.b16 %v910, %v909
        %v917 = vpack.c.b16 %v912, %v911
        %v918 = vpack.c.b16 %v914, %v913
        %v920 = vsel %vm221, %v915, 0
        %v923 = vsel %vm221, %v916, 0
        %v926 = vsel %vm221, %v917, 0
        %v929 = vsel %vm221, %v918, 0
        %v932 = vsel %vm234, %v898, 0
        %934 = vmatpush.bf16.msra.mxu0 0
        %935 = vmatpush.bf16.msra.mxu0 0
        %936 = vmatpush.bf16.msra.mxu0 0
        %937 = vmatpush.bf16.msra.mxu0 0
        %938 = vmatpush.bf16.msra.mxu0 0
        %939 = vmatpush.bf16.msra.mxu0 0
        %940 = vmatpush.bf16.msra.mxu0 0
        %941 = vmatpush.bf16.msra.mxu0 %v932
        %942 = vmatmul.bf16.gmra.mxu0 %v920
        %v943 = vpop.f32.mrf.mxu0
        %v944 = vadd.f32 0.0, %v943
        %v945 = vpop.f32.mrf.mxu0
        %v946 = vadd.f32 0.0, %v945
        %947 = vmatmul.bf16.gmra.mxu0 %v923
        %v948 = vpop.f32.mrf.mxu0
        %v949 = vadd.f32 0.0, %v948
        %v950 = vpop.f32.mrf.mxu0
        %v951 = vadd.f32 0.0, %v950
        %952 = vmatmul.bf16.gmra.mxu0 %v926
        %v953 = vpop.f32.mrf.mxu0
        %v954 = vadd.f32 0.0, %v953
        %v955 = vpop.f32.mrf.mxu0
        %v956 = vadd.f32 0.0, %v955
        %957 = vmatmul.bf16.gmra.mxu0 %v929
        %v958 = vpop.f32.mrf.mxu0
        %v959 = vadd.f32 0.0, %v958
        %v960 = vpop.f32.mrf.mxu0
        %v961 = vadd.f32 0.0, %v960
        %962 = vdwg.mxu0
        %v963 = vadd.f32 %v880, %v944
        %v964 = vadd.f32 %v881, %v946
        %v965 = vadd.f32 %v882, %v949
        %v966 = vadd.f32 %v883, %v951
        %v967 = vadd.f32 %v884, %v954
        %v968 = vadd.f32 %v885, %v956
        %v969 = vadd.f32 %v886, %v959
        %v970 = vadd.f32 %v887, %v961
        %s971 = scalar_lea.vmem %s179, 80
        %v972 = vld [vmem:[%s971] sm:$0xf]
        %v973 = vld [vmem:[%s971 + $0x8] sm:$0xf]
        %v974 = vld [vmem:[%s971 + $0x10] sm:$0xf]
        %v975 = vld [vmem:[%s971 + $0x18] sm:$0xf]
        %v976 = vld [vmem:[%s971 + $0x20] sm:$0xf]
        %v977 = vld [vmem:[%s971 + $0x28] sm:$0xf]
        %v978 = vld [vmem:[%s971 + $0x30] sm:$0xf]
        %v979 = vld [vmem:[%s971 + $0x38] sm:$0xf]
        %s980 = scalar_lea.vmem %s1, 14
        %v981 = vld [vmem:[%s980] sm:$0x3]
        %v990 = vunpack.c.l.b16 %v972
        %v991 = vunpack.c.l.b16 %v973
        %v992 = vunpack.c.l.b16 %v974
        %v993 = vunpack.c.l.b16 %v975
        %v994 = vunpack.c.l.b16 %v976
        %v995 = vunpack.c.l.b16 %v977
        %v996 = vunpack.c.l.b16 %v978
        %v997 = vunpack.c.l.b16 %v979
        %v998 = vpack.c.b16 %v991, %v990
        %v999 = vpack.c.b16 %v993, %v992
        %v1000 = vpack.c.b16 %v995, %v994
        %v1001 = vpack.c.b16 %v997, %v996
        %v1003 = vsel %vm221, %v998, 0
        %v1006 = vsel %vm221, %v999, 0
        %v1009 = vsel %vm221, %v1000, 0
        %v1012 = vsel %vm221, %v1001, 0
        %v1015 = vsel %vm234, %v981, 0
        %1017 = vmatpush.bf16.msra.mxu0 0
        %1018 = vmatpush.bf16.msra.mxu0 0
        %1019 = vmatpush.bf16.msra.mxu0 0
        %1020 = vmatpush.bf16.msra.mxu0 0
        %1021 = vmatpush.bf16.msra.mxu0 0
        %1022 = vmatpush.bf16.msra.mxu0 0
        %1023 = vmatpush.bf16.msra.mxu0 0
        %1024 = vmatpush.bf16.msra.mxu0 %v1015
        %1025 = vmatmul.bf16.gmra.mxu0 %v1003
        %v1026 = vpop.f32.mrf.mxu0
        %v1027 = vadd.f32 0.0, %v1026
        %v1028 = vpop.f32.mrf.mxu0
        %v1029 = vadd.f32 0.0, %v1028
        %1030 = vmatmul.bf16.gmra.mxu0 %v1006
        %v1031 = vpop.f32.mrf.mxu0
        %v1032 = vadd.f32 0.0, %v1031
        %v1033 = vpop.f32.mrf.mxu0
        %v1034 = vadd.f32 0.0, %v1033
        %1035 = vmatmul.bf16.gmra.mxu0 %v1009
        %v1036 = vpop.f32.mrf.mxu0
        %v1037 = vadd.f32 0.0, %v1036
        %v1038 = vpop.f32.mrf.mxu0
        %v1039 = vadd.f32 0.0, %v1038
        %1040 = vmatmul.bf16.gmra.mxu0 %v1012
        %v1041 = vpop.f32.mrf.mxu0
        %v1042 = vadd.f32 0.0, %v1041
        %v1043 = vpop.f32.mrf.mxu0
        %v1044 = vadd.f32 0.0, %v1043
        %1045 = vdwg.mxu0
        %v1046 = vadd.f32 %v963, %v1027
        %v1047 = vadd.f32 %v964, %v1029
        %v1048 = vadd.f32 %v965, %v1032
        %v1049 = vadd.f32 %v966, %v1034
        %v1050 = vadd.f32 %v967, %v1037
        %v1051 = vadd.f32 %v968, %v1039
        %v1052 = vadd.f32 %v969, %v1042
        %v1053 = vadd.f32 %v970, %v1044
        %v1054 = vld [vmem:[%s888] sm:$0xf]
        %v1055 = vld [vmem:[%s888 + $0x4] sm:$0x1]
        %v1056 = vld [vmem:[%s888 + $0x8] sm:$0xf]
        %v1057 = vld [vmem:[%s888 + $0xc] sm:$0x1]
        %v1058 = vld [vmem:[%s888 + $0x10] sm:$0xf]
        %v1059 = vld [vmem:[%s888 + $0x14] sm:$0x1]
        %v1060 = vld [vmem:[%s888 + $0x18] sm:$0xf]
        %v1061 = vld [vmem:[%s888 + $0x1c] sm:$0x1]
        %v1062 = vld [vmem:[%s888 + $0x20] sm:$0xf]
        %v1063 = vld [vmem:[%s888 + $0x24] sm:$0x1]
        %v1064 = vld [vmem:[%s888 + $0x28] sm:$0xf]
        %v1065 = vld [vmem:[%s888 + $0x2c] sm:$0x1]
        %v1066 = vld [vmem:[%s888 + $0x30] sm:$0xf]
        %v1067 = vld [vmem:[%s888 + $0x34] sm:$0x1]
        %v1068 = vld [vmem:[%s888 + $0x38] sm:$0xf]
        %v1069 = vld [vmem:[%s888 + $0x3c] sm:$0x1]
        %v1071 = vshrl.u32 %v1054, 16
        %v1073 = vrot.slane %v1071, 4
        %v1074 = vshll.u32 %v1054, 16
        %v1076 = vrot.slane %v1074, 5
        %v1077 = vor.u32 %v1073, %v1076
        %v1078 = vrot.slane %v1077, 4
        %v1080 = vshll.u32 %v1055, 16
        %v1082 = vrot.slane %v1080, 5
        %v1083 = vsel %vm349, %v1078, %v1082
        %v1085 = vshrl.u32 %v1056, 16
        %v1087 = vrot.slane %v1085, 4
        %v1088 = vshll.u32 %v1056, 16
        %v1090 = vrot.slane %v1088, 5
        %v1091 = vor.u32 %v1087, %v1090
        %v1092 = vrot.slane %v1091, 4
        %v1094 = vshll.u32 %v1057, 16
        %v1096 = vrot.slane %v1094, 5
        %v1097 = vsel %vm349, %v1092, %v1096
        %v1099 = vshrl.u32 %v1058, 16
        %v1101 = vrot.slane %v1099, 4
        %v1102 = vshll.u32 %v1058, 16
        %v1104 = vrot.slane %v1102, 5
        %v1105 = vor.u32 %v1101, %v1104
        %v1106 = vrot.slane %v1105, 4
        %v1108 = vshll.u32 %v1059, 16
        %v1110 = vrot.slane %v1108, 5
        %v1111 = vsel %vm349, %v1106, %v1110
        %v1113 = vshrl.u32 %v1060, 16
        %v1115 = vrot.slane %v1113, 4
        %v1116 = vshll.u32 %v1060, 16
        %v1118 = vrot.slane %v1116, 5
        %v1119 = vor.u32 %v1115, %v1118
        %v1120 = vrot.slane %v1119, 4
        %v1122 = vshll.u32 %v1061, 16
        %v1124 = vrot.slane %v1122, 5
        %v1125 = vsel %vm349, %v1120, %v1124
        %v1127 = vshrl.u32 %v1062, 16
        %v1129 = vrot.slane %v1127, 4
        %v1130 = vshll.u32 %v1062, 16
        %v1132 = vrot.slane %v1130, 5
        %v1133 = vor.u32 %v1129, %v1132
        %v1134 = vrot.slane %v1133, 4
        %v1136 = vshll.u32 %v1063, 16
        %v1138 = vrot.slane %v1136, 5
        %v1139 = vsel %vm349, %v1134, %v1138
        %v1141 = vshrl.u32 %v1064, 16
        %v1143 = vrot.slane %v1141, 4
        %v1144 = vshll.u32 %v1064, 16
        %v1146 = vrot.slane %v1144, 5
        %v1147 = vor.u32 %v1143, %v1146
        %v1148 = vrot.slane %v1147, 4
        %v1150 = vshll.u32 %v1065, 16
        %v1152 = vrot.slane %v1150, 5
        %v1153 = vsel %vm349, %v1148, %v1152
        %v1155 = vshrl.u32 %v1066, 16
        %v1157 = vrot.slane %v1155, 4
        %v1158 = vshll.u32 %v1066, 16
        %v1160 = vrot.slane %v1158, 5
        %v1161 = vor.u32 %v1157, %v1160
        %v1162 = vrot.slane %v1161, 4
        %v1164 = vshll.u32 %v1067, 16
        %v1166 = vrot.slane %v1164, 5
        %v1167 = vsel %vm349, %v1162, %v1166
        %v1169 = vshrl.u32 %v1068, 16
        %v1171 = vrot.slane %v1169, 4
        %v1172 = vshll.u32 %v1068, 16
        %v1174 = vrot.slane %v1172, 5
        %v1175 = vor.u32 %v1171, %v1174
        %v1176 = vrot.slane %v1175, 4
        %v1178 = vshll.u32 %v1069, 16
        %v1180 = vrot.slane %v1178, 5
        %v1181 = vsel %vm349, %v1176, %v1180
        %s1182 = scalar_lea.vmem %s1, 16
        %v1183 = vld [vmem:[%s1182] sm:$0x3]
        %v1184 = vunpack.c.l.b16 %v1083
        %v1185 = vunpack.c.l.b16 %v1097
        %v1186 = vunpack.c.l.b16 %v1111
        %v1187 = vunpack.c.l.b16 %v1125
        %v1188 = vunpack.c.l.b16 %v1139
        %v1189 = vunpack.c.l.b16 %v1153
        %v1190 = vunpack.c.l.b16 %v1167
        %v1191 = vunpack.c.l.b16 %v1181
        %v1192 = vpack.c.b16 %v1185, %v1184
        %v1193 = vpack.c.b16 %v1187, %v1186
        %v1194 = vpack.c.b16 %v1189, %v1188
        %v1195 = vpack.c.b16 %v1191, %v1190
        %v1197 = vsel %vm221, %v1192, 0
        %v1200 = vsel %vm221, %v1193, 0
        %v1203 = vsel %vm221, %v1194, 0
        %v1206 = vsel %vm221, %v1195, 0
        %v1209 = vsel %vm234, %v1183, 0
        %1211 = vmatpush.bf16.msra.mxu0 0
        %1212 = vmatpush.bf16.msra.mxu0 0
        %1213 = vmatpush.bf16.msra.mxu0 0
        %1214 = vmatpush.bf16.msra.mxu0 0
        %1215 = vmatpush.bf16.msra.mxu0 0
        %1216 = vmatpush.bf16.msra.mxu0 0
        %1217 = vmatpush.bf16.msra.mxu0 0
        %1218 = vmatpush.bf16.msra.mxu0 %v1209
        %1219 = vmatmul.bf16.gmra.mxu0 %v1197
        %v1220 = vpop.f32.mrf.mxu0
        %v1221 = vadd.f32 0.0, %v1220
        %v1222 = vpop.f32.mrf.mxu0
        %v1223 = vadd.f32 0.0, %v1222
        %1224 = vmatmul.bf16.gmra.mxu0 %v1200
        %v1225 = vpop.f32.mrf.mxu0
        %v1226 = vadd.f32 0.0, %v1225
        %v1227 = vpop.f32.mrf.mxu0
        %v1228 = vadd.f32 0.0, %v1227
        %1229 = vmatmul.bf16.gmra.mxu0 %v1203
        %v1230 = vpop.f32.mrf.mxu0
        %v1231 = vadd.f32 0.0, %v1230
        %v1232 = vpop.f32.mrf.mxu0
        %v1233 = vadd.f32 0.0, %v1232
        %1234 = vmatmul.bf16.gmra.mxu0 %v1206
        %v1235 = vpop.f32.mrf.mxu0
        %v1236 = vadd.f32 0.0, %v1235
        %v1237 = vpop.f32.mrf.mxu0
        %v1238 = vadd.f32 0.0, %v1237
        %1239 = vdwg.mxu0
        %v1240 = vadd.f32 %v1046, %v1221
        %v1241 = vadd.f32 %v1047, %v1223
        %v1242 = vadd.f32 %v1048, %v1226
        %v1243 = vadd.f32 %v1049, %v1228
        %v1244 = vadd.f32 %v1050, %v1231
        %v1245 = vadd.f32 %v1051, %v1233
        %v1246 = vadd.f32 %v1052, %v1236
        %v1247 = vadd.f32 %v1053, %v1238
        %v1248 = vpack.c.bf16 %v1240, %v1240
        %v1249 = vpack.c.bf16 %v1241, %v1241
        %v1250 = vpack.c.bf16 %v1242, %v1242
        %v1251 = vpack.c.bf16 %v1243, %v1243
        %v1252 = vpack.c.bf16 %v1244, %v1244
        %v1253 = vpack.c.bf16 %v1245, %v1245
        %v1254 = vpack.c.bf16 %v1246, %v1246
        %v1255 = vpack.c.bf16 %v1247, %v1247
        %1256 = vst [vmem:[%s167] sm:$0xf] %v1248
        %1257 = vst [vmem:[%s167 + $0x4] sm:$0xf] %v1249
        %1258 = vst [vmem:[%s167 + $0x8] sm:$0xf] %v1250
        %1259 = vst [vmem:[%s167 + $0xc] sm:$0xf] %v1251
        %1260 = vst [vmem:[%s167 + $0x10] sm:$0xf] %v1252
        %1261 = vst [vmem:[%s167 + $0x14] sm:$0xf] %v1253
        %1262 = vst [vmem:[%s167 + $0x18] sm:$0xf] %v1254
        %1263 = vst [vmem:[%s167 + $0x1c] sm:$0xf] %v1255
        %v1264 = vadd.f32 %v1240, %v1241
        %v1265 = vadd.f32 %v1264, %v1242
        %v1266 = vadd.f32 %v1265, %v1243
        %v1267 = vadd.f32 %v1266, %v1244
        %v1268 = vadd.f32 %v1267, %v1245
        %v1269 = vadd.f32 %v1268, %v1246
        %v1270 = vadd.f32 %v1269, %v1247
        %v1271 = vrot.slane %v1270, 4
        %v1272 = vadd.f32 %v1270, %v1271
        %v1273 = vrot.slane %v1272, 2
        %v1274 = vadd.f32 %v1272, %v1273
        %v1275 = vrot.slane %v1274, 1
        %v1276 = vadd.f32 %v1274, %v1275
        %v1277 = vmul.f32 %v1240, %v1240
        %v1278 = vmul.f32 %v1241, %v1241
        %v1279 = vmul.f32 %v1242, %v1242
        %v1280 = vmul.f32 %v1243, %v1243
        %v1281 = vmul.f32 %v1244, %v1244
        %v1282 = vmul.f32 %v1245, %v1245
        %v1283 = vmul.f32 %v1246, %v1246
        %v1284 = vmul.f32 %v1247, %v1247
        %v1285 = vadd.f32 %v1277, %v1278
        %v1286 = vadd.f32 %v1285, %v1279
        %v1287 = vadd.f32 %v1286, %v1280
        %v1288 = vadd.f32 %v1287, %v1281
        %v1289 = vadd.f32 %v1288, %v1282
        %v1290 = vadd.f32 %v1289, %v1283
        %v1291 = vadd.f32 %v1290, %v1284
        %v1292 = vrot.slane %v1291, 4
        %v1293 = vadd.f32 %v1291, %v1292
        %v1294 = vrot.slane %v1293, 2
        %v1295 = vadd.f32 %v1293, %v1294
        %v1296 = vrot.slane %v1295, 1
        %v1297 = vadd.f32 %v1295, %v1296
        %vm1298 = vcmask 1040384
        %v1299 = vsel %vm1298, %v1276, %v1297
        %v1300 = vsel %vm234, %v1299, 0.0
        %1301 = vst [vmem:[%s174] sm:$0xff] %v1300
        %s1302 = sand.u32 %s76, 1
        %s1303 = scalar_lea.sflag [#allocation3], %s1302
        %s1304 = sand.u32 %s76, 1
        %s1305 = smul.addr %s1304, 32
        %s1306 = scalar_lea.vmem [#allocation2], %s1305
        %s1307 = sand.u32 %s102, 1
        %s1308 = scalar_lea.sflag [#allocation5], %s1307
        %s1309 = sand.u32 %s102, 1
        %s1310 = smul.addr %s1309, 8
        %s1311 = scalar_lea.vmem [#allocation4], %s1310
        // Predicated region
        $region29: #{tpu_custom_call.1} parent=27 // pred_check
          %p1312 = pneg %p86
        $region30: #{tpu_custom_call.1} parent=27 // pred_check_branch
          %1314 = sbr.rel (%p1312) target = $region32
        $region31: #{tpu_custom_call.1} parent=27 // pred_region
          %1316 = vsyncadd %s1303, 0
          %s1317 = smul.addr %s21, 8
          %s1318 = smul.addr %s1317, 4
          %s1319 = scalar_lea.hbm %s2, %s1318
          %s1320 = sshll.u32 %s1306, 4
          %s1321 = int_to_ptr.vmem [resolvable:$true] %s1320
          %s1322 = sshll.u32 %s1319, 4
          %s1323 = int_to_ptr.hbm [resolvable:$true] %s1322
          %1328 = dma.vmem_to_hbm [thread:$0]  %s1321, 512, %s1323, %s1303, 64, 64, 4
        $region32: #{tpu_custom_call.1} parent=27 // pred_fallthru
          _
        // Predicated region
        $region33: #{tpu_custom_call.1} parent=27 // pred_check
          %p1329 = pneg %p112
        $region34: #{tpu_custom_call.1} parent=27 // pred_check_branch
          %1331 = sbr.rel (%p1329) target = $region36
        $region35: #{tpu_custom_call.1} parent=27 // pred_region
          %1333 = vsyncadd %s1308, 0
          %s1334 = smul.addr %s21, 8
          %s1335 = scalar_lea.hbm %s3, %s1334
          %s1337 = sshll.u32 %s1311, 4
          %s1338 = int_to_ptr.vmem [resolvable:$true] %s1337
          %s1339 = sshll.u32 %s1335, 4
          %s1340 = int_to_ptr.hbm [resolvable:$true] %s1339
          %1342 = dma.vmem_to_hbm [thread:$0]  %s1338, 128, %s1340, %s1308
        $region36: #{tpu_custom_call.1} parent=27 // pred_fallthru
          _
      $region28: #{tpu_custom_call.1} parent=5 // pred_fallthru
        _
      %p1343 = scmp.le.s32.totalorder 2, %s16
      // Predicated region
      $region37: #{tpu_custom_call.1} parent=5 // pred_check
        %p1344 = pneg %p1343
      $region38: #{tpu_custom_call.1} parent=5 // pred_check_branch
        %1346 = sbr.rel (%p1344) target = $region40
      $region39: #{tpu_custom_call.1} parent=5 // pred_region
        %s1347 = ssub.s32 %s16, 2
        // Predicated region
        $region41: #{tpu_custom_call.1} parent=39 // pred_check
          %p1348 = pneg %p92
        $region42: #{tpu_custom_call.1} parent=39 // pred_check_branch
          %1350 = sbr.rel (%p1348) target = $region44
        $region43: #{tpu_custom_call.1} parent=39 // pred_region
          %s1351 = sand.u32 %s77, 1
          %s1352 = scalar_lea.sflag [#allocation3], %s1351
          %s1353 = sand.u32 %s77, 1
          %s1354 = smul.addr %s1353, 32
          %s1355 = scalar_lea.vmem [#allocation2], %s1354
          %1357 = dma.done %s1352, 512
        $region44: #{tpu_custom_call.1} parent=39 // pred_fallthru
          _
        // Predicated region
        $region45: #{tpu_custom_call.1} parent=39 // pred_check
          %p1358 = pneg %p118
        $region46: #{tpu_custom_call.1} parent=39 // pred_check_branch
          %1360 = sbr.rel (%p1358) target = $region48
        $region47: #{tpu_custom_call.1} parent=39 // pred_region
          %s1361 = sand.u32 %s103, 1
          %s1362 = scalar_lea.sflag [#allocation5], %s1361
          %s1363 = sand.u32 %s103, 1
          %s1364 = smul.addr %s1363, 8
          %s1365 = scalar_lea.vmem [#allocation4], %s1364
          %1367 = dma.done %s1362, 128
        $region48: #{tpu_custom_call.1} parent=39 // pred_fallthru
          _
      $region40: #{tpu_custom_call.1} parent=5 // pred_fallthru
        _
    $region6: #{tpu_custom_call.1} parent=1 // loop_footer
      %s20 = sadd.s32 1, %s16
    $region7: #{tpu_custom_call.1} parent=1 // loop_footer_branch
      %15 = sbr.rel target = $region3
    $region8: #{tpu_custom_call.1} parent=1 // loop_exit
      _
    %1368 = vsyncpa [#allocation3], 1
    %s1369 = scalar_lea.sflag [#allocation3], 1
    %1370 = vsyncpa %s1369, 1
    %1371 = vsyncpa [#allocation5], 1
    %s1372 = scalar_lea.sflag [#allocation5], 1
    %1373 = vsyncpa %s1372, 1

</llo_original>
